<compile_context>
chip_gen: v7x
topology: tpu7x:2x2x1
jax: 0.10.0
libtpu: 0.0.40
codegen_flags: <defaults>
</compile_context>

<pallas_src>
import functools

import jax
import jax.numpy as jnp
from jax.experimental import pallas as pl
from jax.experimental.pallas import tpu as pltpu

FEAT = 64                  # stand-in for emofan.emo_fc_2[0].in_features
COEFF = 4                  # feat_fusion == 'mood_delta_emotion'
FUSED = FEAT * COEFF       # fc input width (256)
H1, H2, H3 = 1024, 512, 128
NUM_NEURONS_FC = 2
OUT_PAD = 128              # lane-dense padded width of the final layer
BN_EPS = 1e-5


def _round_up(x, m):
    return (x + m - 1) // m * m


def _cdiv(a, b):
    return -(-a // b)


def _num_tensorcores():
    """Best-effort TensorCore count per chip: v7x = 2, v5e/v6e = 1."""
    try:
        kind = jax.devices()[0].device_kind.lower()
    except Exception:
        return 1
    if "v7" in kind or "7x" in kind:
        return 2
    return 1


def _pick_tiling(batch, num_tc):
    """Generation/batch aware batch tiling.

    * Weight-DMA / latency bound regime (small batch, or any batch on a
      single-TC chip that still fits one tile): one grid step, no padded tiles,
      no megacore split (which would double per-core weight traffic).
    * Compute-bound regime (large batch): 256-row tiles fill the 256-wide MXU
      rows on v6e/v7x; the batch axis is marked "parallel" by the caller so
      v7x's two TensorCores share the grid."""
    if batch < 64 or (num_tc == 1 and batch <= 256):
        tb = max(8, _round_up(batch, 8))
        return tb, tb
    if batch >= 512:
        tb = 256
        return tb, _round_up(batch, tb)
    if num_tc >= 2:
        tb = max(8, _round_up(_cdiv(batch, num_tc), 8))  # one tile per TensorCore
        return tb, num_tc * tb
    tb = 128
    return tb, _round_up(batch, tb)


# ----------------------------- Pallas kernel -------------------------------- #
def _fused_head_kernel(x_ref, wc_ref, b1_ref, w2_ref, b2_ref,
                       w3_ref, b3_ref, w4_ref, b4_ref, out_ref):
    """Fusion FC head with the stand-in encoder projection pre-folded into wc.

    BN(eval) is folded into (w_k, b_k) host-side, so each layer is a plain MXU
    dot + bias + ReLU.  Activations are cast to the weight dtype (bf16 by
    default) before each dot; accumulation stays f32.  The last layer is
    zero-padded to 128 lanes so the output store is unmasked (lane-dense)."""
    wdt = wc_ref.dtype
    x = x_ref[...].astype(wdt)
    h = jnp.dot(x, wc_ref[...], preferred_element_type=jnp.float32) + b1_ref[...]
    h = jnp.maximum(h, 0.0).astype(wdt)
    h = jnp.dot(h, w2_ref[...], preferred_element_type=jnp.float32) + b2_ref[...]
    h = jnp.maximum(h, 0.0).astype(wdt)
    h = jnp.dot(h, w3_ref[...], preferred_element_type=jnp.float32) + b3_ref[...]
    h = jnp.maximum(h, 0.0).astype(wdt)
    o = jnp.dot(h, w4_ref[...], preferred_element_type=jnp.float32) + b4_ref[...]
    out_ref[...] = o.astype(out_ref.dtype)


def fused_head_pallas(pooled, head_operands):
    """pooled:        (B, 4*C) f32 concat of the pooled encoder inputs.
       head_operands: prepared (wcomb, b1, w2, b2, w3, b3, w4p, b4p).
       Returns (B, NUM_NEURONS_FC) f32."""
    B, PIN = pooled.shape
    assert head_operands[0].shape[0] == PIN

    num_tc = _num_tensorcores()
    tb, b_pad = _pick_tiling(B, num_tc)
    pooled_p = pooled if b_pad == B else jnp.pad(pooled, ((0, b_pad - B), (0, 0)))
    grid = b_pad // tb

    in_specs = [pl.BlockSpec((tb, PIN), lambda i: (i, 0))]
    in_specs += [pl.BlockSpec(a.shape, lambda i: (0, 0)) for a in head_operands]

    weight_bytes = sum(int(a.size) * a.dtype.itemsize for a in head_operands)
    io_bytes = int(pooled_p.size) * pooled_p.dtype.itemsize + b_pad * OUT_PAD * 4
    flops = 2 * b_pad * (PIN * H1 + H1 * H2 + H2 * H3 + H3 * OUT_PAD)

    out = pl.pallas_call(
        _fused_head_kernel,
        out_shape=jax.ShapeDtypeStruct((b_pad, OUT_PAD), jnp.float32),
        grid_spec=pltpu.PrefetchScalarGridSpec(
            num_scalar_prefetch=0,
            grid=(grid,),
            in_specs=in_specs,
            out_specs=pl.BlockSpec((tb, OUT_PAD), lambda i: (i, 0)),
        ),
        compiler_params=pltpu.CompilerParams(
            dimension_semantics=(("parallel",) if grid > 1 else ("arbitrary",))),
        cost_estimate=pl.CostEstimate(flops=flops, transcendentals=0,
                                      bytes_accessed=weight_bytes + io_bytes),
    )(pooled_p, *head_operands)
    return out[:B, :NUM_NEURONS_FC]


# ------------------------- parameter initialization ------------------------- #
def xavier_uniform(key, fan_in, fan_out):
    limit = (6.0 / (fan_in + fan_out)) ** 0.5
    return jax.random.uniform(key, (fan_in, fan_out), jnp.float32, -limit, limit)


def linear_bias(key, fan_in, fan_out):
    bound = 1.0 / (fan_in ** 0.5)
    return jax.random.uniform(key, (fan_out,), jnp.float32, -bound, bound)


def init_head_params(key):
    dims = [(FUSED, H1), (H1, H2), (H2, H3), (H3, NUM_NEURONS_FC)]
    keys = jax.random.split(key, 8)
    params = []
    for li, (fi, fo) in enumerate(dims):
        w = xavier_uniform(keys[2 * li], fi, fo)          # init_weights: xavier_uniform_
        b = linear_bias(keys[2 * li + 1], fi, fo)         # torch default bias init
        params += [w, b]
        if li < 3:                                        # BatchNorm1d defaults (eval)
            params += [jnp.ones((fo,), jnp.float32),      # gamma
                       jnp.zeros((fo,), jnp.float32),     # beta
                       jnp.zeros((fo,), jnp.float32),     # running_mean
                       jnp.ones((fo,), jnp.float32)]      # running_var
    return tuple(params)


def init_standin_encoders(key, channels):
    km, kd, ke = jax.random.split(key, 3)
    wm = xavier_uniform(km, channels, FEAT)          # mood  -> (B, FEAT)
    wd = xavier_uniform(kd, 2 * channels, 2 * FEAT)  # delta -> (B, 2*FEAT)
    we = xavier_uniform(ke, channels, FEAT)          # emofan-> (B, FEAT)
    return wm, wd, we


def block_diag_proj(wm, wd, we):
    """Combine the three stand-in encoder projections into one block-diagonal
    weight so projection + concat is a single linear map (folded into fc1)."""
    C = wm.shape[0]
    W = jnp.zeros((4 * C, FUSED), jnp.float32)
    W = W.at[0:C, 0:FEAT].set(wm)
    W = W.at[C:3 * C, FEAT:3 * FEAT].set(wd)
    W = W.at[3 * C:4 * C, 3 * FEAT:4 * FEAT].set(we)
    return W


def prepare_head_operands(enc_params, head_params, weight_dtype=jnp.bfloat16):
    """One-time (init) host-side weight preparation: BN(eval) fold, projection
    fold into fc1, lane-dense pad of the final layer, weight dtype cast.
    Params are frozen in eval mode so none of this runs per forward call."""
    wm, wd, we = enc_params
    (w1, b1, g1, be1, m1, v1,
     w2, b2, g2, be2, m2, v2,
     w3, b3, g3, be3, m3, v3,
     w4, b4) = head_params

    # fold BN(eval) into weight/bias:  y = (x@w + b - m)*s + be, s = g/sqrt(v+eps)
    def fold(w, b, g, be, m, v):
        s = g * jax.lax.rsqrt(v + BN_EPS)
        return w * s[None, :], ((b - m) * s + be)[None, :]

    w1f, b1f = fold(w1, b1, g1, be1, m1, v1)
    w2f, b2f = fold(w2, b2, g2, be2, m2, v2)
    w3f, b3f = fold(w3, b3, g3, be3, m3, v3)

    # exact fold: projection (no nonlinearity) @ fc1  ->  (4*C, H1), ~48 KiB f32
    wproj = block_diag_proj(wm, wd, we)
    wcomb = jnp.matmul(wproj, w1f, precision=jax.lax.Precision.HIGHEST)

    # pad final layer to a lane-dense 128-wide output
    w4p = jnp.zeros((H3, OUT_PAD), jnp.float32).at[:, :NUM_NEURONS_FC].set(w4)
    b4p = jnp.zeros((1, OUT_PAD), jnp.float32).at[:, :NUM_NEURONS_FC].set(b4[None, :])

    cast = lambda w: w.astype(weight_dtype)    # biases stay f32 (added post-acc)
    return (cast(wcomb), b1f, cast(w2f), b2f, cast(w3f), b3f, cast(w4p), b4p)


# ------------------------------ full forward -------------------------------- #
def linearnet_forward(clip, image, head_operands):
    """clip: (B, C, T, H, W) NCTHW; image: (B, C, H, W) NCHW. Eval-mode forward."""
    # stand-in encoder pooling (plain JAX reductions over the big spatial dims)
    pooled_all = jnp.mean(clip, axis=(2, 3, 4))                  # mood input
    f0 = jnp.mean(clip[:, :, 0, :, :], axis=(2, 3))              # delta frame 0
    f1 = jnp.mean(clip[:, :, -1, :, :], axis=(2, 3))             # delta frame -1
    img = jnp.mean(image, axis=(2, 3))                           # emofan input
    pooled = jnp.concatenate([pooled_all, f0, f1, img], axis=1)  # (B, 4*C)
    target = fused_head_pallas(pooled, head_operands)
    return {"target": target}


# ----------------------------- reference (JAX) ------------------------------ #
def forward_ref(clip, image, enc_params, head_params):
    wm, wd, we = enc_params
    mm = functools.partial(jnp.matmul, precision=jax.lax.Precision.HIGHEST)
    out1 = mm(jnp.mean(clip, axis=(2, 3, 4)), wm)
    f0 = jnp.mean(clip[:, :, 0, :, :], axis=(2, 3))
    f1 = jnp.mean(clip[:, :, -1, :, :], axis=(2, 3))
    out2 = mm(jnp.concatenate([f0, f1], axis=1), wd)
    out3 = mm(jnp.mean(image, axis=(2, 3)), we)
    fused = jnp.concatenate([out1, out2, out3], axis=1)          # (B, FEAT*4)

    (w1, b1, g1, be1, m1, v1,
     w2, b2, g2, be2, m2, v2,
     w3, b3, g3, be3, m3, v3,
     w4, b4) = head_params

    def bn(h, g, be, m, v):
        return (h - m) / jnp.sqrt(v + BN_EPS) * g + be

    h = jnp.maximum(bn(mm(fused, w1) + b1, g1, be1, m1, v1), 0.0)
    h = jnp.maximum(bn(mm(h, w2) + b2, g2, be2, m2, v2), 0.0)
    h = jnp.maximum(bn(mm(h, w3) + b3, g3, be3, m3, v3), 0.0)
    return mm(h, w4) + b4


if __name__ == "__main__":
    key = jax.random.PRNGKey(0)
    k_clip, k_img, k_enc, k_head = jax.random.split(key, 4)

    B, C, T, H, W = 8, 3, 8, 16, 16
    clip = jax.random.normal(k_clip, (B, C, T, H, W), jnp.float32)
    image = jax.random.normal(k_img, (B, C, H, W), jnp.float32)

    enc_params = init_standin_encoders(k_enc, C)
    head_params = init_head_params(k_head)

    # one-time weight preparation (hoisted out of the forward path)
    ops_bf16 = prepare_head_operands(enc_params, head_params, jnp.bfloat16)
    ops_f32 = prepare_head_operands(enc_params, head_params, jnp.float32)

    fwd = jax.jit(linearnet_forward)

    # default (bf16-weight) path
    out = fwd(clip, image, ops_bf16)
    target = jax.block_until_ready(out["target"])
    assert target.shape == (B, NUM_NEURONS_FC)

    # correctness: f32-weight kernel path vs plain-JAX reference (tight), and
    # bf16 default path vs reference (loose — bf16 MXU rounding).
    ref = forward_ref(clip, image, enc_params, head_params)
    target_f32 = jax.block_until_ready(fwd(clip, image, ops_f32)["target"])
    assert jnp.allclose(target_f32, ref, atol=2e-3, rtol=2e-3), "f32 mismatch vs reference"
    assert jnp.allclose(target, ref, atol=3e-2, rtol=3e-2), "bf16 mismatch vs reference"

    print("KERNEL_OK")
</pallas_src>

<mosaic_0001>
module attributes {stable_mosaic.version = 11 : i64} {
  func.func @_fused_head_kernel(%arg0: i32, %arg1: memref<8x12xf32, #tpu.memory_space<vmem>>, %arg2: memref<12x1024xbf16, #tpu.memory_space<vmem>>, %arg3: memref<1x1024xf32, #tpu.memory_space<vmem>>, %arg4: memref<1024x512xbf16, #tpu.memory_space<vmem>>, %arg5: memref<1x512xf32, #tpu.memory_space<vmem>>, %arg6: memref<512x128xbf16, #tpu.memory_space<vmem>>, %arg7: memref<1x128xf32, #tpu.memory_space<vmem>>, %arg8: memref<128x128xbf16, #tpu.memory_space<vmem>>, %arg9: memref<1x128xf32, #tpu.memory_space<vmem>>, %arg10: memref<8x128xf32, #tpu.memory_space<vmem>>) attributes {dimension_semantics = [#tpu.dimension_semantics<arbitrary>], iteration_bounds = array<i64: 1>, scalar_prefetch = 0 : i64, scratch_operands = 0 : i64, tpu.core_type = #tpu.core_type<tc>, window_params = [{transform_indices = @transform_0, window_bounds = array<i64: 8, 12>}, {pipeline_mode = #tpu.pipeline_mode<synchronous>, transform_indices = @transform_1, window_bounds = array<i64: 12, 1024>}, {pipeline_mode = #tpu.pipeline_mode<synchronous>, transform_indices = @transform_2, window_bounds = array<i64: 1, 1024>}, {pipeline_mode = #tpu.pipeline_mode<synchronous>, transform_indices = @transform_3, window_bounds = array<i64: 1024, 512>}, {pipeline_mode = #tpu.pipeline_mode<synchronous>, transform_indices = @transform_4, window_bounds = array<i64: 1, 512>}, {pipeline_mode = #tpu.pipeline_mode<synchronous>, transform_indices = @transform_5, window_bounds = array<i64: 512, 128>}, {pipeline_mode = #tpu.pipeline_mode<synchronous>, transform_indices = @transform_6, window_bounds = array<i64: 1, 128>}, {pipeline_mode = #tpu.pipeline_mode<synchronous>, transform_indices = @transform_7, window_bounds = array<i64: 128, 128>}, {pipeline_mode = #tpu.pipeline_mode<synchronous>, transform_indices = @transform_8, window_bounds = array<i64: 1, 128>}, {transform_indices = @transform_9, window_bounds = array<i64: 8, 128>}]} {
    %c0 = arith.constant 0 : index
    %c0_0 = arith.constant 0 : index
    %0 = vector.load %arg1[%c0, %c0_0] : memref<8x12xf32, #tpu.memory_space<vmem>>, vector<8x12xf32>
    %1 = arith.truncf %0 : vector<8x12xf32> to vector<8x12xbf16>
    %c0_1 = arith.constant 0 : index
    %c0_2 = arith.constant 0 : index
    %2 = vector.load %arg2[%c0_1, %c0_2] : memref<12x1024xbf16, #tpu.memory_space<vmem>>, vector<12x1024xbf16>
    %cst = arith.constant dense<0.000000e+00> : vector<8x1024xf32>
    %3 = tpu.matmul %1, %2, %cst {dimension_numbers = #tpu.dot_dimension_numbers<[1], [0], [0], [1], [0, 0, 1, 1], [], []>} : vector<8x12xbf16>, vector<12x1024xbf16>, vector<8x1024xf32> -> vector<8x1024xf32>
    %c0_3 = arith.constant 0 : index
    %c0_4 = arith.constant 0 : index
    %4 = vector.load %arg3[%c0_3, %c0_4] : memref<1x1024xf32, #tpu.memory_space<vmem>>, vector<1x1024xf32>
    %5 = vector.broadcast %4 : vector<1x1024xf32> to vector<8x1024xf32>
    %6 = arith.addf %3, %5 : vector<8x1024xf32>
    %cst_5 = arith.constant 0.000000e+00 : f32
    %7 = vector.broadcast %cst_5 : f32 to vector<8x1024xf32>
    %8 = arith.maximumf %6, %7 : vector<8x1024xf32>
    %9 = arith.truncf %8 : vector<8x1024xf32> to vector<8x1024xbf16>
    %c0_6 = arith.constant 0 : index
    %c0_7 = arith.constant 0 : index
    %10 = vector.load %arg4[%c0_6, %c0_7] : memref<1024x512xbf16, #tpu.memory_space<vmem>>, vector<1024x512xbf16>
    %cst_8 = arith.constant dense<0.000000e+00> : vector<8x512xf32>
    %11 = tpu.matmul %9, %10, %cst_8 {dimension_numbers = #tpu.dot_dimension_numbers<[1], [0], [0], [1], [0, 0, 1, 1], [], []>} : vector<8x1024xbf16>, vector<1024x512xbf16>, vector<8x512xf32> -> vector<8x512xf32>
    %c0_9 = arith.constant 0 : index
    %c0_10 = arith.constant 0 : index
    %12 = vector.load %arg5[%c0_9, %c0_10] : memref<1x512xf32, #tpu.memory_space<vmem>>, vector<1x512xf32>
    %13 = vector.broadcast %12 : vector<1x512xf32> to vector<8x512xf32>
    %14 = arith.addf %11, %13 : vector<8x512xf32>
    %cst_11 = arith.constant 0.000000e+00 : f32
    %15 = vector.broadcast %cst_11 : f32 to vector<8x512xf32>
    %16 = arith.maximumf %14, %15 : vector<8x512xf32>
    %17 = arith.truncf %16 : vector<8x512xf32> to vector<8x512xbf16>
    %c0_12 = arith.constant 0 : index
    %c0_13 = arith.constant 0 : index
    %18 = vector.load %arg6[%c0_12, %c0_13] : memref<512x128xbf16, #tpu.memory_space<vmem>>, vector<512x128xbf16>
    %cst_14 = arith.constant dense<0.000000e+00> : vector<8x128xf32>
    %19 = tpu.matmul %17, %18, %cst_14 {dimension_numbers = #tpu.dot_dimension_numbers<[1], [0], [0], [1], [0, 0, 1, 1], [], []>} : vector<8x512xbf16>, vector<512x128xbf16>, vector<8x128xf32> -> vector<8x128xf32>
    %c0_15 = arith.constant 0 : index
    %c0_16 = arith.constant 0 : index
    %20 = vector.load %arg7[%c0_15, %c0_16] : memref<1x128xf32, #tpu.memory_space<vmem>>, vector<1x128xf32>
    %21 = vector.broadcast %20 : vector<1x128xf32> to vector<8x128xf32>
    %22 = arith.addf %19, %21 : vector<8x128xf32>
    %cst_17 = arith.constant 0.000000e+00 : f32
    %23 = vector.broadcast %cst_17 : f32 to vector<8x128xf32>
    %24 = arith.maximumf %22, %23 : vector<8x128xf32>
    %25 = arith.truncf %24 : vector<8x128xf32> to vector<8x128xbf16>
    %c0_18 = arith.constant 0 : index
    %c0_19 = arith.constant 0 : index
    %26 = vector.load %arg8[%c0_18, %c0_19] : memref<128x128xbf16, #tpu.memory_space<vmem>>, vector<128x128xbf16>
    %cst_20 = arith.constant dense<0.000000e+00> : vector<8x128xf32>
    %27 = tpu.matmul %25, %26, %cst_20 {dimension_numbers = #tpu.dot_dimension_numbers<[1], [0], [0], [1], [0, 0, 1, 1], [], []>} : vector<8x128xbf16>, vector<128x128xbf16>, vector<8x128xf32> -> vector<8x128xf32>
    %c0_21 = arith.constant 0 : index
    %c0_22 = arith.constant 0 : index
    %28 = vector.load %arg9[%c0_21, %c0_22] : memref<1x128xf32, #tpu.memory_space<vmem>>, vector<1x128xf32>
    %29 = vector.broadcast %28 : vector<1x128xf32> to vector<8x128xf32>
    %30 = arith.addf %27, %29 : vector<8x128xf32>
    %c0_23 = arith.constant 0 : index
    %c0_24 = arith.constant 0 : index
    %31 = vector.load %arg10[%c0_23, %c0_24] : memref<8x128xf32, #tpu.memory_space<vmem>>, vector<8x128xf32>
    tpu.vector_store %arg10[%c0_23, %c0_24], %30 {strides = array<i32>} : memref<8x128xf32, #tpu.memory_space<vmem>>, vector<8x128xf32>,
    return
  }
  func.func @transform_0(%arg0: i32) -> (i32, i32) {
    %c0_i32 = arith.constant 0 : i32
    %c0_i32_0 = arith.constant 0 : i32
    return %arg0, %c0_i32 : i32, i32
  }
  func.func @transform_1(%arg0: i32) -> (i32, i32) {
    %c0_i32 = arith.constant 0 : i32
    %c0_i32_0 = arith.constant 0 : i32
    %c0_i32_1 = arith.constant 0 : i32
    return %c0_i32, %c0_i32_0 : i32, i32
  }
  func.func @transform_2(%arg0: i32) -> (i32, i32) {
    %c0_i32 = arith.constant 0 : i32
    %c0_i32_0 = arith.constant 0 : i32
    %c0_i32_1 = arith.constant 0 : i32
    return %c0_i32, %c0_i32_0 : i32, i32
  }
  func.func @transform_3(%arg0: i32) -> (i32, i32) {
    %c0_i32 = arith.constant 0 : i32
    %c0_i32_0 = arith.constant 0 : i32
    %c0_i32_1 = arith.constant 0 : i32
    return %c0_i32, %c0_i32_0 : i32, i32
  }
  func.func @transform_4(%arg0: i32) -> (i32, i32) {
    %c0_i32 = arith.constant 0 : i32
    %c0_i32_0 = arith.constant 0 : i32
    %c0_i32_1 = arith.constant 0 : i32
    return %c0_i32, %c0_i32_0 : i32, i32
  }
  func.func @transform_5(%arg0: i32) -> (i32, i32) {
    %c0_i32 = arith.constant 0 : i32
    %c0_i32_0 = arith.constant 0 : i32
    %c0_i32_1 = arith.constant 0 : i32
    return %c0_i32, %c0_i32_0 : i32, i32
  }
  func.func @transform_6(%arg0: i32) -> (i32, i32) {
    %c0_i32 = arith.constant 0 : i32
    %c0_i32_0 = arith.constant 0 : i32
    %c0_i32_1 = arith.constant 0 : i32
    return %c0_i32, %c0_i32_0 : i32, i32
  }
  func.func @transform_7(%arg0: i32) -> (i32, i32) {
    %c0_i32 = arith.constant 0 : i32
    %c0_i32_0 = arith.constant 0 : i32
    %c0_i32_1 = arith.constant 0 : i32
    return %c0_i32, %c0_i32_0 : i32, i32
  }
  func.func @transform_8(%arg0: i32) -> (i32, i32) {
    %c0_i32 = arith.constant 0 : i32
    %c0_i32_0 = arith.constant 0 : i32
    %c0_i32_1 = arith.constant 0 : i32
    return %c0_i32, %c0_i32_0 : i32, i32
  }
  func.func @transform_9(%arg0: i32) -> (i32, i32) {
    %c0_i32 = arith.constant 0 : i32
    %c0_i32_0 = arith.constant 0 : i32
    return %arg0, %c0_i32 : i32, i32
  }
}

</mosaic_0001>

<llo_original>
// kernel: linearnet_forward.1
$region0: #{linearnet_forward.1}
  #allocation0 [shape = 'u32[]', space=smem, size = 0x4, offset = 0x4, fixed_abs, tag = 'smem constant byte address 0x4 - core index']
  #allocation1 [shape = 'u32[144,128]{1,0:T(1,128)}', space=vmem, size = 0x12000, scoped, tag = 'internal scratch']
  %s0 = inlined_call_operand.vmem [shape: f32[8,12], index: 0, kind: input, shape index: {}]
  %s1 = inlined_call_operand.vmem [shape: bf16[12,1024], index: 1, kind: input, shape index: {}]
  %s2 = inlined_call_operand.vmem [shape: f32[1,1024], index: 2, kind: input, shape index: {}]
  %s3 = inlined_call_operand.vmem [shape: bf16[1024,512], index: 3, kind: input, shape index: {}]
  %s4 = inlined_call_operand.vmem [shape: f32[1,512], index: 4, kind: input, shape index: {}]
  %s5 = inlined_call_operand.vmem [shape: bf16[512,128], index: 5, kind: input, shape index: {}]
  %s6 = inlined_call_operand.vmem [shape: f32[1,128], index: 6, kind: input, shape index: {}]
  %s7 = inlined_call_operand.vmem [shape: bf16[128,128], index: 7, kind: input, shape index: {}]
  %s8 = inlined_call_operand.vmem [shape: f32[1,128], index: 8, kind: input, shape index: {}]
  %s9 = inlined_call_operand.vmem [shape: f32[8,128], index: 9, kind: output, shape index: {}]
  %s10 = sld [smem:[#allocation0]]
  $region46: #{linearnet_forward.1} parent=0
    _
  %s12 = ssub.s32 1, %s10
  %s13 = scalar_select 0, %s12, %s10
  // Predicated region
  $region2: #{linearnet_forward.1} parent=0 // pred_check
    _
  $region3: #{linearnet_forward.1} parent=0 // pred_check_branch
    %15 = sbr.rel (0) target = $region5
  $region4: #{linearnet_forward.1} parent=0 // pred_region
    _
  $region5: #{linearnet_forward.1} parent=0 // pred_fallthru
    _
  // Predicated region
  $region6: #{linearnet_forward.1} parent=0 // pred_check
    _
  $region7: #{linearnet_forward.1} parent=0 // pred_check_branch
    %17 = sbr.rel (0) target = $region9
  $region8: #{linearnet_forward.1} parent=0 // pred_region
    _
  $region9: #{linearnet_forward.1} parent=0 // pred_fallthru
    _
  // Predicated region
  $region10: #{linearnet_forward.1} parent=0 // pred_check
    _
  $region11: #{linearnet_forward.1} parent=0 // pred_check_branch
    %19 = sbr.rel (0) target = $region13
  $region12: #{linearnet_forward.1} parent=0 // pred_region
    _
  $region13: #{linearnet_forward.1} parent=0 // pred_fallthru
    _
  // Predicated region
  $region14: #{linearnet_forward.1} parent=0 // pred_check
    _
  $region15: #{linearnet_forward.1} parent=0 // pred_check_branch
    %21 = sbr.rel (0) target = $region17
  $region16: #{linearnet_forward.1} parent=0 // pred_region
    _
  $region17: #{linearnet_forward.1} parent=0 // pred_fallthru
    _
  // Predicated region
  $region18: #{linearnet_forward.1} parent=0 // pred_check
    _
  $region19: #{linearnet_forward.1} parent=0 // pred_check_branch
    %23 = sbr.rel (0) target = $region21
  $region20: #{linearnet_forward.1} parent=0 // pred_region
    _
  $region21: #{linearnet_forward.1} parent=0 // pred_fallthru
    _
  // Predicated region
  $region22: #{linearnet_forward.1} parent=0 // pred_check
    _
  $region23: #{linearnet_forward.1} parent=0 // pred_check_branch
    %25 = sbr.rel (0) target = $region25
  $region24: #{linearnet_forward.1} parent=0 // pred_region
    _
  $region25: #{linearnet_forward.1} parent=0 // pred_fallthru
    _
  // Predicated region
  $region26: #{linearnet_forward.1} parent=0 // pred_check
    _
  $region27: #{linearnet_forward.1} parent=0 // pred_check_branch
    %27 = sbr.rel (0) target = $region29
  $region28: #{linearnet_forward.1} parent=0 // pred_region
    _
  $region29: #{linearnet_forward.1} parent=0 // pred_fallthru
    _
  // Predicated region
  $region30: #{linearnet_forward.1} parent=0 // pred_check
    _
  $region31: #{linearnet_forward.1} parent=0 // pred_check_branch
    %29 = sbr.rel (0) target = $region33
  $region32: #{linearnet_forward.1} parent=0 // pred_region
    _
  $region33: #{linearnet_forward.1} parent=0 // pred_fallthru
    _
  // Predicated region
  $region34: #{linearnet_forward.1} parent=0 // pred_check
    _
  $region35: #{linearnet_forward.1} parent=0 // pred_check_branch
    %31 = sbr.rel (0) target = $region37
  $region36: #{linearnet_forward.1} parent=0 // pred_region
    _
  $region37: #{linearnet_forward.1} parent=0 // pred_fallthru
    _
  %v33 = vld [vmem:[%s0] sm:$0xff]
  %v34 = vpack.c.bf16 %v33, %v33
  %v35 = vld [vmem:[%s1] sm:$0xff]
  %v36 = vld [vmem:[%s1 + $0x8] sm:$0xff]
  %v37 = vld [vmem:[%s1 + $0x10] sm:$0xff]
  %v38 = vld [vmem:[%s1 + $0x18] sm:$0xff]
  %v39 = vld [vmem:[%s1 + $0x20] sm:$0x33]
  %v40 = vld [vmem:[%s1 + $0x28] sm:$0x33]
  %v41 = vld [vmem:[%s1 + $0x30] sm:$0x33]
  %v42 = vld [vmem:[%s1 + $0x38] sm:$0x33]
  %v43 = vld [vmem:[%s2] sm:$0xff]
  %v45 = vlaneseq
  %v46 = vshrl.u32 %v45, 7
  %v47 = vsub.s32 0, %v46
  %v48 = vrot.slane %v43, %v47
  %v49 = vlaneseq
  %v50 = vshrl.u32 %v49, 7
  %v51 = vsub.s32 1, %v50
  %v52 = vrot.slane %v43, %v51
  %v53 = vlaneseq
  %v54 = vshrl.u32 %v53, 7
  %v55 = vsub.s32 2, %v54
  %v56 = vrot.slane %v43, %v55
  %v57 = vlaneseq
  %v58 = vshrl.u32 %v57, 7
  %v59 = vsub.s32 3, %v58
  %v60 = vrot.slane %v43, %v59
  %v61 = vlaneseq
  %v62 = vshrl.u32 %v61, 7
  %v63 = vsub.s32 4, %v62
  %v64 = vrot.slane %v43, %v63
  %v65 = vlaneseq
  %v66 = vshrl.u32 %v65, 7
  %v67 = vsub.s32 5, %v66
  %v68 = vrot.slane %v43, %v67
  %v69 = vlaneseq
  %v70 = vshrl.u32 %v69, 7
  %v71 = vsub.s32 6, %v70
  %v72 = vrot.slane %v43, %v71
  %v73 = vlaneseq
  %v74 = vshrl.u32 %v73, 7
  %v75 = vsub.s32 7, %v74
  %v76 = vrot.slane %v43, %v75
  %v93 = vunpack.c.l.b16 %v35
  %v94 = vunpack.c.h.b16 %v35
  %v95 = vunpack.c.l.b16 %v36
  %v96 = vunpack.c.h.b16 %v36
  %v97 = vunpack.c.l.b16 %v37
  %v98 = vunpack.c.h.b16 %v37
  %v99 = vunpack.c.l.b16 %v38
  %v100 = vunpack.c.h.b16 %v38
  %v101 = vunpack.c.l.b16 %v39
  %v102 = vunpack.c.h.b16 %v39
  %v103 = vunpack.c.l.b16 %v40
  %v104 = vunpack.c.h.b16 %v40
  %v105 = vunpack.c.l.b16 %v41
  %v106 = vunpack.c.h.b16 %v41
  %v107 = vunpack.c.l.b16 %v42
  %v108 = vunpack.c.h.b16 %v42
  %v109 = vpack.c.b16 %v101, %v93
  %v110 = vpack.c.b16 %v102, %v94
  %v111 = vpack.c.b16 %v103, %v95
  %v112 = vpack.c.b16 %v104, %v96
  %v113 = vpack.c.b16 %v105, %v97
  %v114 = vpack.c.b16 %v106, %v98
  %v115 = vpack.c.b16 %v107, %v99
  %v116 = vpack.c.b16 %v108, %v100
  %vm117 = vcmask 97280
  %v119 = vsel %vm117, %v34, 0
  %vm121 = vcmask 1045504
  %v123 = vsel %vm121, %v109, 0
  %v126 = vsel %vm121, %v110, 0
  %v129 = vsel %vm121, %v111, 0
  %v132 = vsel %vm121, %v112, 0
  %v135 = vsel %vm121, %v113, 0
  %v138 = vsel %vm121, %v114, 0
  %v141 = vsel %vm121, %v115, 0
  %v144 = vsel %vm121, %v116, 0
  %146 = vmatprep.subr.bf16.mxu0 %v126
  %147 = vmatpush1.bf16.msra.mxu0 %v123
  %148 = vmatprep.subr.bf16.mxu0 0
  %149 = vmatpush1.bf16.msra.mxu0 0
  %150 = vmatprep.subr.bf16.mxu0 0
  %151 = vmatpush1.bf16.msra.mxu0 0
  %152 = vmatprep.subr.bf16.mxu0 0
  %153 = vmatpush1.bf16.msra.mxu0 0
  %154 = vmatprep.subr.bf16.mxu0 0
  %155 = vmatpush1.bf16.msra.mxu0 0
  %156 = vmatprep.subr.bf16.mxu0 0
  %157 = vmatpush1.bf16.msra.mxu0 0
  %158 = vmatprep.subr.bf16.mxu0 0
  %159 = vmatpush1.bf16.msra.mxu0 0
  %160 = vmatprep.subr.bf16.mxu0 0
  %161 = vmatpush1.bf16.msra.mxu0 0
  %162 = vmatprep.subr.bf16.mxu0 0
  %163 = vmatpush1.bf16.msra.mxu0 0
  %164 = vmatprep.subr.bf16.mxu0 0
  %165 = vmatpush1.bf16.msra.mxu0 0
  %166 = vmatprep.subr.bf16.mxu0 0
  %167 = vmatpush1.bf16.msra.mxu0 0
  %168 = vmatprep.subr.bf16.mxu0 0
  %169 = vmatpush1.bf16.msra.mxu0 0
  %170 = vmatprep.subr.bf16.mxu0 0
  %171 = vmatpush1.bf16.msra.mxu0 0
  %172 = vmatprep.subr.bf16.mxu0 0
  %173 = vmatpush1.bf16.msra.mxu0 0
  %174 = vmatprep.subr.bf16.mxu0 0
  %175 = vmatpush1.bf16.msra.mxu0 0
  %176 = vmatprep.subr.bf16.mxu0 0
  %177 = vmatpush1.bf16.msra.mxu0 0
  %178 = vmatprep.mubr.bf16.mxu0 0
  %179 = vmatmul.mubr.bf16.gmra.mrb[0].mxu0 %v119
  %v180 = vpop.f32.mrb[0].mxu0
  %v181 = vadd.f32 %v48, %v180
  %v182 = vpop.f32.mrb[0].mxu0
  %v183 = vadd.f32 %v52, %v182
  %v184 = vpop.f32.mrb[0].mxu0
  %v185 = vpop.f32.mrb[0].mxu0
  %186 = vdwg.mxu0
  %187 = vmatprep.subr.bf16.mxu0 %v132
  %188 = vmatpush1.bf16.msra.mxu0 %v129
  %189 = vmatprep.subr.bf16.mxu0 0
  %190 = vmatpush1.bf16.msra.mxu0 0
  %191 = vmatprep.subr.bf16.mxu0 0
  %192 = vmatpush1.bf16.msra.mxu0 0
  %193 = vmatprep.subr.bf16.mxu0 0
  %194 = vmatpush1.bf16.msra.mxu0 0
  %195 = vmatprep.subr.bf16.mxu0 0
  %196 = vmatpush1.bf16.msra.mxu0 0
  %197 = vmatprep.subr.bf16.mxu0 0
  %198 = vmatpush1.bf16.msra.mxu0 0
  %199 = vmatprep.subr.bf16.mxu0 0
  %200 = vmatpush1.bf16.msra.mxu0 0
  %201 = vmatprep.subr.bf16.mxu0 0
  %202 = vmatpush1.bf16.msra.mxu0 0
  %203 = vmatprep.subr.bf16.mxu0 0
  %204 = vmatpush1.bf16.msra.mxu0 0
  %205 = vmatprep.subr.bf16.mxu0 0
  %206 = vmatpush1.bf16.msra.mxu0 0
  %207 = vmatprep.subr.bf16.mxu0 0
  %208 = vmatpush1.bf16.msra.mxu0 0
  %209 = vmatprep.subr.bf16.mxu0 0
  %210 = vmatpush1.bf16.msra.mxu0 0
  %211 = vmatprep.subr.bf16.mxu0 0
  %212 = vmatpush1.bf16.msra.mxu0 0
  %213 = vmatprep.subr.bf16.mxu0 0
  %214 = vmatpush1.bf16.msra.mxu0 0
  %215 = vmatprep.subr.bf16.mxu0 0
  %216 = vmatpush1.bf16.msra.mxu0 0
  %217 = vmatprep.subr.bf16.mxu0 0
  %218 = vmatpush1.bf16.msra.mxu0 0
  %219 = vmatprep.mubr.bf16.mxu0 0
  %220 = vmatmul.mubr.bf16.gmra.mrb[0].mxu0 %v119
  %v221 = vpop.f32.mrb[0].mxu0
  %v222 = vadd.f32 %v56, %v221
  %v223 = vpop.f32.mrb[0].mxu0
  %v224 = vadd.f32 %v60, %v223
  %v225 = vpop.f32.mrb[0].mxu0
  %v226 = vpop.f32.mrb[0].mxu0
  %227 = vdwg.mxu0
  %228 = vmatprep.subr.bf16.mxu0 %v138
  %229 = vmatpush1.bf16.msra.mxu0 %v135
  %230 = vmatprep.subr.bf16.mxu0 0
  %231 = vmatpush1.bf16.msra.mxu0 0
  %232 = vmatprep.subr.bf16.mxu0 0
  %233 = vmatpush1.bf16.msra.mxu0 0
  %234 = vmatprep.subr.bf16.mxu0 0
  %235 = vmatpush1.bf16.msra.mxu0 0
  %236 = vmatprep.subr.bf16.mxu0 0
  %237 = vmatpush1.bf16.msra.mxu0 0
  %238 = vmatprep.subr.bf16.mxu0 0
  %239 = vmatpush1.bf16.msra.mxu0 0
  %240 = vmatprep.subr.bf16.mxu0 0
  %241 = vmatpush1.bf16.msra.mxu0 0
  %242 = vmatprep.subr.bf16.mxu0 0
  %243 = vmatpush1.bf16.msra.mxu0 0
  %244 = vmatprep.subr.bf16.mxu0 0
  %245 = vmatpush1.bf16.msra.mxu0 0
  %246 = vmatprep.subr.bf16.mxu0 0
  %247 = vmatpush1.bf16.msra.mxu0 0
  %248 = vmatprep.subr.bf16.mxu0 0
  %249 = vmatpush1.bf16.msra.mxu0 0
  %250 = vmatprep.subr.bf16.mxu0 0
  %251 = vmatpush1.bf16.msra.mxu0 0
  %252 = vmatprep.subr.bf16.mxu0 0
  %253 = vmatpush1.bf16.msra.mxu0 0
  %254 = vmatprep.subr.bf16.mxu0 0
  %255 = vmatpush1.bf16.msra.mxu0 0
  %256 = vmatprep.subr.bf16.mxu0 0
  %257 = vmatpush1.bf16.msra.mxu0 0
  %258 = vmatprep.subr.bf16.mxu0 0
  %259 = vmatpush1.bf16.msra.mxu0 0
  %260 = vmatprep.mubr.bf16.mxu0 0
  %261 = vmatmul.mubr.bf16.gmra.mrb[0].mxu0 %v119
  %v262 = vpop.f32.mrb[0].mxu0
  %v263 = vadd.f32 %v64, %v262
  %v264 = vpop.f32.mrb[0].mxu0
  %v265 = vadd.f32 %v68, %v264
  %v266 = vpop.f32.mrb[0].mxu0
  %v267 = vpop.f32.mrb[0].mxu0
  %268 = vdwg.mxu0
  %269 = vmatprep.subr.bf16.mxu0 %v144
  %270 = vmatpush1.bf16.msra.mxu0 %v141
  %271 = vmatprep.subr.bf16.mxu0 0
  %272 = vmatpush1.bf16.msra.mxu0 0
  %273 = vmatprep.subr.bf16.mxu0 0
  %274 = vmatpush1.bf16.msra.mxu0 0
  %275 = vmatprep.subr.bf16.mxu0 0
  %276 = vmatpush1.bf16.msra.mxu0 0
  %277 = vmatprep.subr.bf16.mxu0 0
  %278 = vmatpush1.bf16.msra.mxu0 0
  %279 = vmatprep.subr.bf16.mxu0 0
  %280 = vmatpush1.bf16.msra.mxu0 0
  %281 = vmatprep.subr.bf16.mxu0 0
  %282 = vmatpush1.bf16.msra.mxu0 0
  %283 = vmatprep.subr.bf16.mxu0 0
  %284 = vmatpush1.bf16.msra.mxu0 0
  %285 = vmatprep.subr.bf16.mxu0 0
  %286 = vmatpush1.bf16.msra.mxu0 0
  %287 = vmatprep.subr.bf16.mxu0 0
  %288 = vmatpush1.bf16.msra.mxu0 0
  %289 = vmatprep.subr.bf16.mxu0 0
  %290 = vmatpush1.bf16.msra.mxu0 0
  %291 = vmatprep.subr.bf16.mxu0 0
  %292 = vmatpush1.bf16.msra.mxu0 0
  %293 = vmatprep.subr.bf16.mxu0 0
  %294 = vmatpush1.bf16.msra.mxu0 0
  %295 = vmatprep.subr.bf16.mxu0 0
  %296 = vmatpush1.bf16.msra.mxu0 0
  %297 = vmatprep.subr.bf16.mxu0 0
  %298 = vmatpush1.bf16.msra.mxu0 0
  %299 = vmatprep.subr.bf16.mxu0 0
  %300 = vmatpush1.bf16.msra.mxu0 0
  %301 = vmatprep.mubr.bf16.mxu0 0
  %302 = vmatmul.mubr.bf16.gmra.mrb[0].mxu0 %v119
  %v303 = vpop.f32.mrb[0].mxu0
  %v304 = vadd.f32 %v72, %v303
  %v305 = vpop.f32.mrb[0].mxu0
  %v306 = vadd.f32 %v76, %v305
  %v307 = vpop.f32.mrb[0].mxu0
  %v308 = vpop.f32.mrb[0].mxu0
  %309 = vdwg.mxu0
  %v310 = vmax.f32 %v181, 0.0
  %v311 = vmax.f32 %v183, 0.0
  %v312 = vmax.f32 %v222, 0.0
  %v313 = vmax.f32 %v224, 0.0
  %v314 = vmax.f32 %v263, 0.0
  %v315 = vmax.f32 %v265, 0.0
  %v316 = vmax.f32 %v304, 0.0
  %v317 = vmax.f32 %v306, 0.0
  %v318 = vpack.c.bf16 %v310, %v310
  %v319 = vpack.c.bf16 %v311, %v311
  %v320 = vpack.c.bf16 %v312, %v312
  %v321 = vpack.c.bf16 %v313, %v313
  %v322 = vpack.c.bf16 %v314, %v314
  %v323 = vpack.c.bf16 %v315, %v315
  %v324 = vpack.c.bf16 %v316, %v316
  %v325 = vpack.c.bf16 %v317, %v317
  %v326 = vld [vmem:[%s3] sm:$0xff]
  %v327 = vld [vmem:[%s3 + $0x8] sm:$0xff]
  %v328 = vld [vmem:[%s3 + $0x10] sm:$0xff]
  %v329 = vld [vmem:[%s3 + $0x18] sm:$0xff]
  %v330 = vld [vmem:[%s3 + $0x20] sm:$0xff]
  %v331 = vld [vmem:[%s3 + $0x28] sm:$0xff]
  %v332 = vld [vmem:[%s3 + $0x30] sm:$0xff]
  %v333 = vld [vmem:[%s3 + $0x38] sm:$0xff]
  %v334 = vld [vmem:[%s3 + $0x40] sm:$0xff]
  %v335 = vld [vmem:[%s3 + $0x48] sm:$0xff]
  %v336 = vld [vmem:[%s3 + $0x50] sm:$0xff]
  %v337 = vld [vmem:[%s3 + $0x58] sm:$0xff]
  %v338 = vld [vmem:[%s3 + $0x60] sm:$0xff]
  %v339 = vld [vmem:[%s3 + $0x68] sm:$0xff]
  %v340 = vld [vmem:[%s3 + $0x70] sm:$0xff]
  %v341 = vld [vmem:[%s3 + $0x78] sm:$0xff]
  %v342 = vld [vmem:[%s3 + $0x80] sm:$0xff]
  %v343 = vld [vmem:[%s3 + $0x88] sm:$0xff]
  %v344 = vld [vmem:[%s3 + $0x90] sm:$0xff]
  %v345 = vld [vmem:[%s3 + $0x98] sm:$0xff]
  %v346 = vld [vmem:[%s3 + $0xa0] sm:$0xff]
  %v347 = vld [vmem:[%s3 + $0xa8] sm:$0xff]
  %v348 = vld [vmem:[%s3 + $0xb0] sm:$0xff]
  %v349 = vld [vmem:[%s3 + $0xb8] sm:$0xff]
  %v350 = vld [vmem:[%s3 + $0xc0] sm:$0xff]
  %v351 = vld [vmem:[%s3 + $0xc8] sm:$0xff]
  %v352 = vld [vmem:[%s3 + $0xd0] sm:$0xff]
  %v353 = vld [vmem:[%s3 + $0xd8] sm:$0xff]
  %v354 = vld [vmem:[%s3 + $0xe0] sm:$0xff]
  %v355 = vld [vmem:[%s3 + $0xe8] sm:$0xff]
  %v356 = vld [vmem:[%s3 + $0xf0] sm:$0xff]
  %v357 = vld [vmem:[%s3 + $0xf8] sm:$0xff]
  %v358 = vld [vmem:[%s3 + $0x100] sm:$0xff]
  %v359 = vld [vmem:[%s3 + $0x108] sm:$0xff]
  %v360 = vld [vmem:[%s3 + $0x110] sm:$0xff]
  %v361 = vld [vmem:[%s3 + $0x118] sm:$0xff]
  %v362 = vld [vmem:[%s3 + $0x120] sm:$0xff]
  %v363 = vld [vmem:[%s3 + $0x128] sm:$0xff]
  %v364 = vld [vmem:[%s3 + $0x130] sm:$0xff]
  %v365 = vld [vmem:[%s3 + $0x138] sm:$0xff]
  %v366 = vld [vmem:[%s3 + $0x140] sm:$0xff]
  %v367 = vld [vmem:[%s3 + $0x148] sm:$0xff]
  %v368 = vld [vmem:[%s3 + $0x150] sm:$0xff]
  %v369 = vld [vmem:[%s3 + $0x158] sm:$0xff]
  %v370 = vld [vmem:[%s3 + $0x160] sm:$0xff]
  %v371 = vld [vmem:[%s3 + $0x168] sm:$0xff]
  %v372 = vld [vmem:[%s3 + $0x170] sm:$0xff]
  %v373 = vld [vmem:[%s3 + $0x178] sm:$0xff]
  %v374 = vld [vmem:[%s3 + $0x180] sm:$0xff]
  %v375 = vld [vmem:[%s3 + $0x188] sm:$0xff]
  %v376 = vld [vmem:[%s3 + $0x190] sm:$0xff]
  %v377 = vld [vmem:[%s3 + $0x198] sm:$0xff]
  %v378 = vld [vmem:[%s3 + $0x1a0] sm:$0xff]
  %v379 = vld [vmem:[%s3 + $0x1a8] sm:$0xff]
  %v380 = vld [vmem:[%s3 + $0x1b0] sm:$0xff]
  %v381 = vld [vmem:[%s3 + $0x1b8] sm:$0xff]
  %v382 = vld [vmem:[%s3 + $0x1c0] sm:$0xff]
  %v383 = vld [vmem:[%s3 + $0x1c8] sm:$0xff]
  %v384 = vld [vmem:[%s3 + $0x1d0] sm:$0xff]
  %v385 = vld [vmem:[%s3 + $0x1d8] sm:$0xff]
  %v386 = vld [vmem:[%s3 + $0x1e0] sm:$0xff]
  %v387 = vld [vmem:[%s3 + $0x1e8] sm:$0xff]
  %v388 = vld [vmem:[%s3 + $0x1f0] sm:$0xff]
  %v389 = vld [vmem:[%s3 + $0x1f8] sm:$0xff]
  %v390 = vld [vmem:[%s3 + $0x200] sm:$0xff]
  %v391 = vld [vmem:[%s3 + $0x208] sm:$0xff]
  %v392 = vld [vmem:[%s3 + $0x210] sm:$0xff]
  %v393 = vld [vmem:[%s3 + $0x218] sm:$0xff]
  %v394 = vld [vmem:[%s3 + $0x220] sm:$0xff]
  %v395 = vld [vmem:[%s3 + $0x228] sm:$0xff]
  %v396 = vld [vmem:[%s3 + $0x230] sm:$0xff]
  %v397 = vld [vmem:[%s3 + $0x238] sm:$0xff]
  %v398 = vld [vmem:[%s3 + $0x240] sm:$0xff]
  %v399 = vld [vmem:[%s3 + $0x248] sm:$0xff]
  %v400 = vld [vmem:[%s3 + $0x250] sm:$0xff]
  %v401 = vld [vmem:[%s3 + $0x258] sm:$0xff]
  %v402 = vld [vmem:[%s3 + $0x260] sm:$0xff]
  %v403 = vld [vmem:[%s3 + $0x268] sm:$0xff]
  %v404 = vld [vmem:[%s3 + $0x270] sm:$0xff]
  %v405 = vld [vmem:[%s3 + $0x278] sm:$0xff]
  %v406 = vld [vmem:[%s3 + $0x280] sm:$0xff]
  %v407 = vld [vmem:[%s3 + $0x288] sm:$0xff]
  %v408 = vld [vmem:[%s3 + $0x290] sm:$0xff]
  %v409 = vld [vmem:[%s3 + $0x298] sm:$0xff]
  %v410 = vld [vmem:[%s3 + $0x2a0] sm:$0xff]
  %v411 = vld [vmem:[%s3 + $0x2a8] sm:$0xff]
  %v412 = vld [vmem:[%s3 + $0x2b0] sm:$0xff]
  %v413 = vld [vmem:[%s3 + $0x2b8] sm:$0xff]
  %v414 = vld [vmem:[%s3 + $0x2c0] sm:$0xff]
  %v415 = vld [vmem:[%s3 + $0x2c8] sm:$0xff]
  %v416 = vld [vmem:[%s3 + $0x2d0] sm:$0xff]
  %v417 = vld [vmem:[%s3 + $0x2d8] sm:$0xff]
  %v418 = vld [vmem:[%s3 + $0x2e0] sm:$0xff]
  %v419 = vld [vmem:[%s3 + $0x2e8] sm:$0xff]
  %v420 = vld [vmem:[%s3 + $0x2f0] sm:$0xff]
  %v421 = vld [vmem:[%s3 + $0x2f8] sm:$0xff]
  %v422 = vld [vmem:[%s3 + $0x300] sm:$0xff]
  %v423 = vld [vmem:[%s3 + $0x308] sm:$0xff]
  %v424 = vld [vmem:[%s3 + $0x310] sm:$0xff]
  %v425 = vld [vmem:[%s3 + $0x318] sm:$0xff]
  %v426 = vld [vmem:[%s3 + $0x320] sm:$0xff]
  %v427 = vld [vmem:[%s3 + $0x328] sm:$0xff]
  %v428 = vld [vmem:[%s3 + $0x330] sm:$0xff]
  %v429 = vld [vmem:[%s3 + $0x338] sm:$0xff]
  %v430 = vld [vmem:[%s3 + $0x340] sm:$0xff]
  %v431 = vld [vmem:[%s3 + $0x348] sm:$0xff]
  %v432 = vld [vmem:[%s3 + $0x350] sm:$0xff]
  %v433 = vld [vmem:[%s3 + $0x358] sm:$0xff]
  %v434 = vld [vmem:[%s3 + $0x360] sm:$0xff]
  %v435 = vld [vmem:[%s3 + $0x368] sm:$0xff]
  %v436 = vld [vmem:[%s3 + $0x370] sm:$0xff]
  %v437 = vld [vmem:[%s3 + $0x378] sm:$0xff]
  %v438 = vld [vmem:[%s3 + $0x380] sm:$0xff]
  %v439 = vld [vmem:[%s3 + $0x388] sm:$0xff]
  %v440 = vld [vmem:[%s3 + $0x390] sm:$0xff]
  %v441 = vld [vmem:[%s3 + $0x398] sm:$0xff]
  %v442 = vld [vmem:[%s3 + $0x3a0] sm:$0xff]
  %v443 = vld [vmem:[%s3 + $0x3a8] sm:$0xff]
  %v444 = vld [vmem:[%s3 + $0x3b0] sm:$0xff]
  %v445 = vld [vmem:[%s3 + $0x3b8] sm:$0xff]
  %v446 = vld [vmem:[%s3 + $0x3c0] sm:$0xff]
  %v447 = vld [vmem:[%s3 + $0x3c8] sm:$0xff]
  %v448 = vld [vmem:[%s3 + $0x3d0] sm:$0xff]
  %v449 = vld [vmem:[%s3 + $0x3d8] sm:$0xff]
  %v450 = vld [vmem:[%s3 + $0x3e0] sm:$0xff]
  %v451 = vld [vmem:[%s3 + $0x3e8] sm:$0xff]
  %v452 = vld [vmem:[%s3 + $0x3f0] sm:$0xff]
  %v453 = vld [vmem:[%s3 + $0x3f8] sm:$0xff]
  %v454 = vld [vmem:[%s3 + $0x400] sm:$0xff]
  %v455 = vld [vmem:[%s3 + $0x408] sm:$0xff]
  %v456 = vld [vmem:[%s3 + $0x410] sm:$0xff]
  %v457 = vld [vmem:[%s3 + $0x418] sm:$0xff]
  %v458 = vld [vmem:[%s3 + $0x420] sm:$0xff]
  %v459 = vld [vmem:[%s3 + $0x428] sm:$0xff]
  %v460 = vld [vmem:[%s3 + $0x430] sm:$0xff]
  %v461 = vld [vmem:[%s3 + $0x438] sm:$0xff]
  %v462 = vld [vmem:[%s3 + $0x440] sm:$0xff]
  %v463 = vld [vmem:[%s3 + $0x448] sm:$0xff]
  %v464 = vld [vmem:[%s3 + $0x450] sm:$0xff]
  %v465 = vld [vmem:[%s3 + $0x458] sm:$0xff]
  %v466 = vld [vmem:[%s3 + $0x460] sm:$0xff]
  %v467 = vld [vmem:[%s3 + $0x468] sm:$0xff]
  %v468 = vld [vmem:[%s3 + $0x470] sm:$0xff]
  %v469 = vld [vmem:[%s3 + $0x478] sm:$0xff]
  %v470 = vld [vmem:[%s3 + $0x480] sm:$0xff]
  %v471 = vld [vmem:[%s3 + $0x488] sm:$0xff]
  %v472 = vld [vmem:[%s3 + $0x490] sm:$0xff]
  %v473 = vld [vmem:[%s3 + $0x498] sm:$0xff]
  %v474 = vld [vmem:[%s3 + $0x4a0] sm:$0xff]
  %v475 = vld [vmem:[%s3 + $0x4a8] sm:$0xff]
  %v476 = vld [vmem:[%s3 + $0x4b0] sm:$0xff]
  %v477 = vld [vmem:[%s3 + $0x4b8] sm:$0xff]
  %v478 = vld [vmem:[%s3 + $0x4c0] sm:$0xff]
  %v479 = vld [vmem:[%s3 + $0x4c8] sm:$0xff]
  %v480 = vld [vmem:[%s3 + $0x4d0] sm:$0xff]
  %v481 = vld [vmem:[%s3 + $0x4d8] sm:$0xff]
  %v482 = vld [vmem:[%s3 + $0x4e0] sm:$0xff]
  %v483 = vld [vmem:[%s3 + $0x4e8] sm:$0xff]
  %v484 = vld [vmem:[%s3 + $0x4f0] sm:$0xff]
  %v485 = vld [vmem:[%s3 + $0x4f8] sm:$0xff]
  %v486 = vld [vmem:[%s3 + $0x500] sm:$0xff]
  %v487 = vld [vmem:[%s3 + $0x508] sm:$0xff]
  %v488 = vld [vmem:[%s3 + $0x510] sm:$0xff]
  %v489 = vld [vmem:[%s3 + $0x518] sm:$0xff]
  %v490 = vld [vmem:[%s3 + $0x520] sm:$0xff]
  %v491 = vld [vmem:[%s3 + $0x528] sm:$0xff]
  %v492 = vld [vmem:[%s3 + $0x530] sm:$0xff]
  %v493 = vld [vmem:[%s3 + $0x538] sm:$0xff]
  %v494 = vld [vmem:[%s3 + $0x540] sm:$0xff]
  %v495 = vld [vmem:[%s3 + $0x548] sm:$0xff]
  %v496 = vld [vmem:[%s3 + $0x550] sm:$0xff]
  %v497 = vld [vmem:[%s3 + $0x558] sm:$0xff]
  %v498 = vld [vmem:[%s3 + $0x560] sm:$0xff]
  %v499 = vld [vmem:[%s3 + $0x568] sm:$0xff]
  %v500 = vld [vmem:[%s3 + $0x570] sm:$0xff]
  %v501 = vld [vmem:[%s3 + $0x578] sm:$0xff]
  %v502 = vld [vmem:[%s3 + $0x580] sm:$0xff]
  %v503 = vld [vmem:[%s3 + $0x588] sm:$0xff]
  %v504 = vld [vmem:[%s3 + $0x590] sm:$0xff]
  %v505 = vld [vmem:[%s3 + $0x598] sm:$0xff]
  %v506 = vld [vmem:[%s3 + $0x5a0] sm:$0xff]
  %v507 = vld [vmem:[%s3 + $0x5a8] sm:$0xff]
  %v508 = vld [vmem:[%s3 + $0x5b0] sm:$0xff]
  %v509 = vld [vmem:[%s3 + $0x5b8] sm:$0xff]
  %v510 = vld [vmem:[%s3 + $0x5c0] sm:$0xff]
  %v511 = vld [vmem:[%s3 + $0x5c8] sm:$0xff]
  %v512 = vld [vmem:[%s3 + $0x5d0] sm:$0xff]
  %v513 = vld [vmem:[%s3 + $0x5d8] sm:$0xff]
  %v514 = vld [vmem:[%s3 + $0x5e0] sm:$0xff]
  %v515 = vld [vmem:[%s3 + $0x5e8] sm:$0xff]
  %v516 = vld [vmem:[%s3 + $0x5f0] sm:$0xff]
  %v517 = vld [vmem:[%s3 + $0x5f8] sm:$0xff]
  %v518 = vld [vmem:[%s3 + $0x600] sm:$0xff]
  %v519 = vld [vmem:[%s3 + $0x608] sm:$0xff]
  %v520 = vld [vmem:[%s3 + $0x610] sm:$0xff]
  %v521 = vld [vmem:[%s3 + $0x618] sm:$0xff]
  %v522 = vld [vmem:[%s3 + $0x620] sm:$0xff]
  %v523 = vld [vmem:[%s3 + $0x628] sm:$0xff]
  %v524 = vld [vmem:[%s3 + $0x630] sm:$0xff]
  %v525 = vld [vmem:[%s3 + $0x638] sm:$0xff]
  %v526 = vld [vmem:[%s3 + $0x640] sm:$0xff]
  %v527 = vld [vmem:[%s3 + $0x648] sm:$0xff]
  %v528 = vld [vmem:[%s3 + $0x650] sm:$0xff]
  %v529 = vld [vmem:[%s3 + $0x658] sm:$0xff]
  %v530 = vld [vmem:[%s3 + $0x660] sm:$0xff]
  %v531 = vld [vmem:[%s3 + $0x668] sm:$0xff]
  %v532 = vld [vmem:[%s3 + $0x670] sm:$0xff]
  %v533 = vld [vmem:[%s3 + $0x678] sm:$0xff]
  %v534 = vld [vmem:[%s3 + $0x680] sm:$0xff]
  %v535 = vld [vmem:[%s3 + $0x688] sm:$0xff]
  %v536 = vld [vmem:[%s3 + $0x690] sm:$0xff]
  %v537 = vld [vmem:[%s3 + $0x698] sm:$0xff]
  %v538 = vld [vmem:[%s3 + $0x6a0] sm:$0xff]
  %v539 = vld [vmem:[%s3 + $0x6a8] sm:$0xff]
  %v540 = vld [vmem:[%s3 + $0x6b0] sm:$0xff]
  %v541 = vld [vmem:[%s3 + $0x6b8] sm:$0xff]
  %v542 = vld [vmem:[%s3 + $0x6c0] sm:$0xff]
  %v543 = vld [vmem:[%s3 + $0x6c8] sm:$0xff]
  %v544 = vld [vmem:[%s3 + $0x6d0] sm:$0xff]
  %v545 = vld [vmem:[%s3 + $0x6d8] sm:$0xff]
  %v546 = vld [vmem:[%s3 + $0x6e0] sm:$0xff]
  %v547 = vld [vmem:[%s3 + $0x6e8] sm:$0xff]
  %v548 = vld [vmem:[%s3 + $0x6f0] sm:$0xff]
  %v549 = vld [vmem:[%s3 + $0x6f8] sm:$0xff]
  %v550 = vld [vmem:[%s3 + $0x700] sm:$0xff]
  %v551 = vld [vmem:[%s3 + $0x708] sm:$0xff]
  %v552 = vld [vmem:[%s3 + $0x710] sm:$0xff]
  %v553 = vld [vmem:[%s3 + $0x718] sm:$0xff]
  %v554 = vld [vmem:[%s3 + $0x720] sm:$0xff]
  %v555 = vld [vmem:[%s3 + $0x728] sm:$0xff]
  %v556 = vld [vmem:[%s3 + $0x730] sm:$0xff]
  %v557 = vld [vmem:[%s3 + $0x738] sm:$0xff]
  %v558 = vld [vmem:[%s3 + $0x740] sm:$0xff]
  %v559 = vld [vmem:[%s3 + $0x748] sm:$0xff]
  %v560 = vld [vmem:[%s3 + $0x750] sm:$0xff]
  %v561 = vld [vmem:[%s3 + $0x758] sm:$0xff]
  %v562 = vld [vmem:[%s3 + $0x760] sm:$0xff]
  %v563 = vld [vmem:[%s3 + $0x768] sm:$0xff]
  %v564 = vld [vmem:[%s3 + $0x770] sm:$0xff]
  %v565 = vld [vmem:[%s3 + $0x778] sm:$0xff]
  %v566 = vld [vmem:[%s3 + $0x780] sm:$0xff]
  %v567 = vld [vmem:[%s3 + $0x788] sm:$0xff]
  %v568 = vld [vmem:[%s3 + $0x790] sm:$0xff]
  %v569 = vld [vmem:[%s3 + $0x798] sm:$0xff]
  %v570 = vld [vmem:[%s3 + $0x7a0] sm:$0xff]
  %v571 = vld [vmem:[%s3 + $0x7a8] sm:$0xff]
  %v572 = vld [vmem:[%s3 + $0x7b0] sm:$0xff]
  %v573 = vld [vmem:[%s3 + $0x7b8] sm:$0xff]
  %v574 = vld [vmem:[%s3 + $0x7c0] sm:$0xff]
  %v575 = vld [vmem:[%s3 + $0x7c8] sm:$0xff]
  %v576 = vld [vmem:[%s3 + $0x7d0] sm:$0xff]
  %v577 = vld [vmem:[%s3 + $0x7d8] sm:$0xff]
  %v578 = vld [vmem:[%s3 + $0x7e0] sm:$0xff]
  %v579 = vld [vmem:[%s3 + $0x7e8] sm:$0xff]
  %v580 = vld [vmem:[%s3 + $0x7f0] sm:$0xff]
  %v581 = vld [vmem:[%s3 + $0x7f8] sm:$0xff]
  %v582 = vld [vmem:[%s4] sm:$0xf]
  %v584 = vlaneseq
  %v585 = vshrl.u32 %v584, 7
  %v586 = vsub.s32 0, %v585
  %v587 = vrot.slane %v582, %v586
  %v588 = vlaneseq
  %v589 = vshrl.u32 %v588, 7
  %v590 = vsub.s32 1, %v589
  %v591 = vrot.slane %v582, %v590
  %v592 = vlaneseq
  %v593 = vshrl.u32 %v592, 7
  %v594 = vsub.s32 2, %v593
  %v595 = vrot.slane %v582, %v594
  %v596 = vlaneseq
  %v597 = vshrl.u32 %v596, 7
  %v598 = vsub.s32 3, %v597
  %v599 = vrot.slane %v582, %v598
  %v860 = vunpack.c.l.b16 %v326
  %v861 = vunpack.c.h.b16 %v326
  %v862 = vunpack.c.l.b16 %v327
  %v863 = vunpack.c.h.b16 %v327
  %v864 = vunpack.c.l.b16 %v328
  %v865 = vunpack.c.h.b16 %v328
  %v866 = vunpack.c.l.b16 %v329
  %v867 = vunpack.c.h.b16 %v329
  %v868 = vunpack.c.l.b16 %v330
  %v869 = vunpack.c.h.b16 %v330
  %v870 = vunpack.c.l.b16 %v331
  %v871 = vunpack.c.h.b16 %v331
  %v872 = vunpack.c.l.b16 %v332
  %v873 = vunpack.c.h.b16 %v332
  %v874 = vunpack.c.l.b16 %v333
  %v875 = vunpack.c.h.b16 %v333
  %v876 = vunpack.c.l.b16 %v334
  %v877 = vunpack.c.h.b16 %v334
  %v878 = vunpack.c.l.b16 %v335
  %v879 = vunpack.c.h.b16 %v335
  %v880 = vunpack.c.l.b16 %v336
  %v881 = vunpack.c.h.b16 %v336
  %v882 = vunpack.c.l.b16 %v337
  %v883 = vunpack.c.h.b16 %v337
  %v884 = vunpack.c.l.b16 %v338
  %v885 = vunpack.c.h.b16 %v338
  %v886 = vunpack.c.l.b16 %v339
  %v887 = vunpack.c.h.b16 %v339
  %v888 = vunpack.c.l.b16 %v340
  %v889 = vunpack.c.h.b16 %v340
  %v890 = vunpack.c.l.b16 %v341
  %v891 = vunpack.c.h.b16 %v341
  %v892 = vunpack.c.l.b16 %v342
  %v893 = vunpack.c.h.b16 %v342
  %v894 = vunpack.c.l.b16 %v343
  %v895 = vunpack.c.h.b16 %v343
  %v896 = vunpack.c.l.b16 %v344
  %v897 = vunpack.c.h.b16 %v344
  %v898 = vunpack.c.l.b16 %v345
  %v899 = vunpack.c.h.b16 %v345
  %v900 = vunpack.c.l.b16 %v346
  %v901 = vunpack.c.h.b16 %v346
  %v902 = vunpack.c.l.b16 %v347
  %v903 = vunpack.c.h.b16 %v347
  %v904 = vunpack.c.l.b16 %v348
  %v905 = vunpack.c.h.b16 %v348
  %v906 = vunpack.c.l.b16 %v349
  %v907 = vunpack.c.h.b16 %v349
  %v908 = vunpack.c.l.b16 %v350
  %v909 = vunpack.c.h.b16 %v350
  %v910 = vunpack.c.l.b16 %v351
  %v911 = vunpack.c.h.b16 %v351
  %v912 = vunpack.c.l.b16 %v352
  %v913 = vunpack.c.h.b16 %v352
  %v914 = vunpack.c.l.b16 %v353
  %v915 = vunpack.c.h.b16 %v353
  %v916 = vunpack.c.l.b16 %v354
  %v917 = vunpack.c.h.b16 %v354
  %v918 = vunpack.c.l.b16 %v355
  %v919 = vunpack.c.h.b16 %v355
  %v920 = vunpack.c.l.b16 %v356
  %v921 = vunpack.c.h.b16 %v356
  %v922 = vunpack.c.l.b16 %v357
  %v923 = vunpack.c.h.b16 %v357
  %v924 = vunpack.c.l.b16 %v358
  %v925 = vunpack.c.h.b16 %v358
  %v926 = vunpack.c.l.b16 %v359
  %v927 = vunpack.c.h.b16 %v359
  %v928 = vunpack.c.l.b16 %v360
  %v929 = vunpack.c.h.b16 %v360
  %v930 = vunpack.c.l.b16 %v361
  %v931 = vunpack.c.h.b16 %v361
  %v932 = vunpack.c.l.b16 %v362
  %v933 = vunpack.c.h.b16 %v362
  %v934 = vunpack.c.l.b16 %v363
  %v935 = vunpack.c.h.b16 %v363
  %v936 = vunpack.c.l.b16 %v364
  %v937 = vunpack.c.h.b16 %v364
  %v938 = vunpack.c.l.b16 %v365
  %v939 = vunpack.c.h.b16 %v365
  %v940 = vunpack.c.l.b16 %v366
  %v941 = vunpack.c.h.b16 %v366
  %v942 = vunpack.c.l.b16 %v367
  %v943 = vunpack.c.h.b16 %v367
  %v944 = vunpack.c.l.b16 %v368
  %v945 = vunpack.c.h.b16 %v368
  %v946 = vunpack.c.l.b16 %v369
  %v947 = vunpack.c.h.b16 %v369
  %v948 = vunpack.c.l.b16 %v370
  %v949 = vunpack.c.h.b16 %v370
  %v950 = vunpack.c.l.b16 %v371
  %v951 = vunpack.c.h.b16 %v371
  %v952 = vunpack.c.l.b16 %v372
  %v953 = vunpack.c.h.b16 %v372
  %v954 = vunpack.c.l.b16 %v373
  %v955 = vunpack.c.h.b16 %v373
  %v956 = vunpack.c.l.b16 %v374
  %v957 = vunpack.c.h.b16 %v374
  %v958 = vunpack.c.l.b16 %v375
  %v959 = vunpack.c.h.b16 %v375
  %v960 = vunpack.c.l.b16 %v376
  %v961 = vunpack.c.h.b16 %v376
  %v962 = vunpack.c.l.b16 %v377
  %v963 = vunpack.c.h.b16 %v377
  %v964 = vunpack.c.l.b16 %v378
  %v965 = vunpack.c.h.b16 %v378
  %v966 = vunpack.c.l.b16 %v379
  %v967 = vunpack.c.h.b16 %v379
  %v968 = vunpack.c.l.b16 %v380
  %v969 = vunpack.c.h.b16 %v380
  %v970 = vunpack.c.l.b16 %v381
  %v971 = vunpack.c.h.b16 %v381
  %v972 = vunpack.c.l.b16 %v382
  %v973 = vunpack.c.h.b16 %v382
  %v974 = vunpack.c.l.b16 %v383
  %v975 = vunpack.c.h.b16 %v383
  %v976 = vunpack.c.l.b16 %v384
  %v977 = vunpack.c.h.b16 %v384
  %v978 = vunpack.c.l.b16 %v385
  %v979 = vunpack.c.h.b16 %v385
  %v980 = vunpack.c.l.b16 %v386
  %v981 = vunpack.c.h.b16 %v386
  %v982 = vunpack.c.l.b16 %v387
  %v983 = vunpack.c.h.b16 %v387
  %v984 = vunpack.c.l.b16 %v388
  %v985 = vunpack.c.h.b16 %v388
  %v986 = vunpack.c.l.b16 %v389
  %v987 = vunpack.c.h.b16 %v389
  %v988 = vunpack.c.l.b16 %v390
  %v989 = vunpack.c.h.b16 %v390
  %v990 = vunpack.c.l.b16 %v391
  %v991 = vunpack.c.h.b16 %v391
  %v992 = vunpack.c.l.b16 %v392
  %v993 = vunpack.c.h.b16 %v392
  %v994 = vunpack.c.l.b16 %v393
  %v995 = vunpack.c.h.b16 %v393
  %v996 = vunpack.c.l.b16 %v394
  %v997 = vunpack.c.h.b16 %v394
  %v998 = vunpack.c.l.b16 %v395
  %v999 = vunpack.c.h.b16 %v395
  %v1000 = vunpack.c.l.b16 %v396
  %v1001 = vunpack.c.h.b16 %v396
  %v1002 = vunpack.c.l.b16 %v397
  %v1003 = vunpack.c.h.b16 %v397
  %v1004 = vunpack.c.l.b16 %v398
  %v1005 = vunpack.c.h.b16 %v398
  %v1006 = vunpack.c.l.b16 %v399
  %v1007 = vunpack.c.h.b16 %v399
  %v1008 = vunpack.c.l.b16 %v400
  %v1009 = vunpack.c.h.b16 %v400
  %v1010 = vunpack.c.l.b16 %v401
  %v1011 = vunpack.c.h.b16 %v401
  %v1012 = vunpack.c.l.b16 %v402
  %v1013 = vunpack.c.h.b16 %v402
  %v1014 = vunpack.c.l.b16 %v403
  %v1015 = vunpack.c.h.b16 %v403
  %v1016 = vunpack.c.l.b16 %v404
  %v1017 = vunpack.c.h.b16 %v404
  %v1018 = vunpack.c.l.b16 %v405
  %v1019 = vunpack.c.h.b16 %v405
  %v1020 = vunpack.c.l.b16 %v406
  %v1021 = vunpack.c.h.b16 %v406
  %v1022 = vunpack.c.l.b16 %v407
  %v1023 = vunpack.c.h.b16 %v407
  %v1024 = vunpack.c.l.b16 %v408
  %v1025 = vunpack.c.h.b16 %v408
  %v1026 = vunpack.c.l.b16 %v409
  %v1027 = vunpack.c.h.b16 %v409
  %v1028 = vunpack.c.l.b16 %v410
  %v1029 = vunpack.c.h.b16 %v410
  %v1030 = vunpack.c.l.b16 %v411
  %v1031 = vunpack.c.h.b16 %v411
  %v1032 = vunpack.c.l.b16 %v412
  %v1033 = vunpack.c.h.b16 %v412
  %v1034 = vunpack.c.l.b16 %v413
  %v1035 = vunpack.c.h.b16 %v413
  %v1036 = vunpack.c.l.b16 %v414
  %v1037 = vunpack.c.h.b16 %v414
  %v1038 = vunpack.c.l.b16 %v415
  %v1039 = vunpack.c.h.b16 %v415
  %v1040 = vunpack.c.l.b16 %v416
  %v1041 = vunpack.c.h.b16 %v416
  %v1042 = vunpack.c.l.b16 %v417
  %v1043 = vunpack.c.h.b16 %v417
  %v1044 = vunpack.c.l.b16 %v418
  %v1045 = vunpack.c.h.b16 %v418
  %v1046 = vunpack.c.l.b16 %v419
  %v1047 = vunpack.c.h.b16 %v419
  %v1048 = vunpack.c.l.b16 %v420
  %v1049 = vunpack.c.h.b16 %v420
  %v1050 = vunpack.c.l.b16 %v421
  %v1051 = vunpack.c.h.b16 %v421
  %v1052 = vunpack.c.l.b16 %v422
  %v1053 = vunpack.c.h.b16 %v422
  %v1054 = vunpack.c.l.b16 %v423
  %v1055 = vunpack.c.h.b16 %v423
  %v1056 = vunpack.c.l.b16 %v424
  %v1057 = vunpack.c.h.b16 %v424
  %v1058 = vunpack.c.l.b16 %v425
  %v1059 = vunpack.c.h.b16 %v425
  %v1060 = vunpack.c.l.b16 %v426
  %v1061 = vunpack.c.h.b16 %v426
  %v1062 = vunpack.c.l.b16 %v427
  %v1063 = vunpack.c.h.b16 %v427
  %v1064 = vunpack.c.l.b16 %v428
  %v1065 = vunpack.c.h.b16 %v428
  %v1066 = vunpack.c.l.b16 %v429
  %v1067 = vunpack.c.h.b16 %v429
  %v1068 = vunpack.c.l.b16 %v430
  %v1069 = vunpack.c.h.b16 %v430
  %v1070 = vunpack.c.l.b16 %v431
  %v1071 = vunpack.c.h.b16 %v431
  %v1072 = vunpack.c.l.b16 %v432
  %v1073 = vunpack.c.h.b16 %v432
  %v1074 = vunpack.c.l.b16 %v433
  %v1075 = vunpack.c.h.b16 %v433
  %v1076 = vunpack.c.l.b16 %v434
  %v1077 = vunpack.c.h.b16 %v434
  %v1078 = vunpack.c.l.b16 %v435
  %v1079 = vunpack.c.h.b16 %v435
  %v1080 = vunpack.c.l.b16 %v436
  %v1081 = vunpack.c.h.b16 %v436
  %v1082 = vunpack.c.l.b16 %v437
  %v1083 = vunpack.c.h.b16 %v437
  %v1084 = vunpack.c.l.b16 %v438
  %v1085 = vunpack.c.h.b16 %v438
  %v1086 = vunpack.c.l.b16 %v439
  %v1087 = vunpack.c.h.b16 %v439
  %v1088 = vunpack.c.l.b16 %v440
  %v1089 = vunpack.c.h.b16 %v440
  %v1090 = vunpack.c.l.b16 %v441
  %v1091 = vunpack.c.h.b16 %v441
  %v1092 = vunpack.c.l.b16 %v442
  %v1093 = vunpack.c.h.b16 %v442
  %v1094 = vunpack.c.l.b16 %v443
  %v1095 = vunpack.c.h.b16 %v443
  %v1096 = vunpack.c.l.b16 %v444
  %v1097 = vunpack.c.h.b16 %v444
  %v1098 = vunpack.c.l.b16 %v445
  %v1099 = vunpack.c.h.b16 %v445
  %v1100 = vunpack.c.l.b16 %v446
  %v1101 = vunpack.c.h.b16 %v446
  %v1102 = vunpack.c.l.b16 %v447
  %v1103 = vunpack.c.h.b16 %v447
  %v1104 = vunpack.c.l.b16 %v448
  %v1105 = vunpack.c.h.b16 %v448
  %v1106 = vunpack.c.l.b16 %v449
  %v1107 = vunpack.c.h.b16 %v449
  %v1108 = vunpack.c.l.b16 %v450
  %v1109 = vunpack.c.h.b16 %v450
  %v1110 = vunpack.c.l.b16 %v451
  %v1111 = vunpack.c.h.b16 %v451
  %v1112 = vunpack.c.l.b16 %v452
  %v1113 = vunpack.c.h.b16 %v452
  %v1114 = vunpack.c.l.b16 %v453
  %v1115 = vunpack.c.h.b16 %v453
  %v1116 = vunpack.c.l.b16 %v454
  %v1117 = vunpack.c.h.b16 %v454
  %v1118 = vunpack.c.l.b16 %v455
  %v1119 = vunpack.c.h.b16 %v455
  %v1120 = vunpack.c.l.b16 %v456
  %v1121 = vunpack.c.h.b16 %v456
  %v1122 = vunpack.c.l.b16 %v457
  %v1123 = vunpack.c.h.b16 %v457
  %v1124 = vunpack.c.l.b16 %v458
  %v1125 = vunpack.c.h.b16 %v458
  %v1126 = vunpack.c.l.b16 %v459
  %v1127 = vunpack.c.h.b16 %v459
  %v1128 = vunpack.c.l.b16 %v460
  %v1129 = vunpack.c.h.b16 %v460
  %v1130 = vunpack.c.l.b16 %v461
  %v1131 = vunpack.c.h.b16 %v461
  %v1132 = vunpack.c.l.b16 %v462
  %v1133 = vunpack.c.h.b16 %v462
  %v1134 = vunpack.c.l.b16 %v463
  %v1135 = vunpack.c.h.b16 %v463
  %v1136 = vunpack.c.l.b16 %v464
  %v1137 = vunpack.c.h.b16 %v464
  %v1138 = vunpack.c.l.b16 %v465
  %v1139 = vunpack.c.h.b16 %v465
  %v1140 = vunpack.c.l.b16 %v466
  %v1141 = vunpack.c.h.b16 %v466
  %v1142 = vunpack.c.l.b16 %v467
  %v1143 = vunpack.c.h.b16 %v467
  %v1144 = vunpack.c.l.b16 %v468
  %v1145 = vunpack.c.h.b16 %v468
  %v1146 = vunpack.c.l.b16 %v469
  %v1147 = vunpack.c.h.b16 %v469
  %v1148 = vunpack.c.l.b16 %v470
  %v1149 = vunpack.c.h.b16 %v470
  %v1150 = vunpack.c.l.b16 %v471
  %v1151 = vunpack.c.h.b16 %v471
  %v1152 = vunpack.c.l.b16 %v472
  %v1153 = vunpack.c.h.b16 %v472
  %v1154 = vunpack.c.l.b16 %v473
  %v1155 = vunpack.c.h.b16 %v473
  %v1156 = vunpack.c.l.b16 %v474
  %v1157 = vunpack.c.h.b16 %v474
  %v1158 = vunpack.c.l.b16 %v475
  %v1159 = vunpack.c.h.b16 %v475
  %v1160 = vunpack.c.l.b16 %v476
  %v1161 = vunpack.c.h.b16 %v476
  %v1162 = vunpack.c.l.b16 %v477
  %v1163 = vunpack.c.h.b16 %v477
  %v1164 = vunpack.c.l.b16 %v478
  %v1165 = vunpack.c.h.b16 %v478
  %v1166 = vunpack.c.l.b16 %v479
  %v1167 = vunpack.c.h.b16 %v479
  %v1168 = vunpack.c.l.b16 %v480
  %v1169 = vunpack.c.h.b16 %v480
  %v1170 = vunpack.c.l.b16 %v481
  %v1171 = vunpack.c.h.b16 %v481
  %v1172 = vunpack.c.l.b16 %v482
  %v1173 = vunpack.c.h.b16 %v482
  %v1174 = vunpack.c.l.b16 %v483
  %v1175 = vunpack.c.h.b16 %v483
  %v1176 = vunpack.c.l.b16 %v484
  %v1177 = vunpack.c.h.b16 %v484
  %v1178 = vunpack.c.l.b16 %v485
  %v1179 = vunpack.c.h.b16 %v485
  %v1180 = vunpack.c.l.b16 %v486
  %v1181 = vunpack.c.h.b16 %v486
  %v1182 = vunpack.c.l.b16 %v487
  %v1183 = vunpack.c.h.b16 %v487
  %v1184 = vunpack.c.l.b16 %v488
  %v1185 = vunpack.c.h.b16 %v488
  %v1186 = vunpack.c.l.b16 %v489
  %v1187 = vunpack.c.h.b16 %v489
  %v1188 = vunpack.c.l.b16 %v490
  %v1189 = vunpack.c.h.b16 %v490
  %v1190 = vunpack.c.l.b16 %v491
  %v1191 = vunpack.c.h.b16 %v491
  %v1192 = vunpack.c.l.b16 %v492
  %v1193 = vunpack.c.h.b16 %v492
  %v1194 = vunpack.c.l.b16 %v493
  %v1195 = vunpack.c.h.b16 %v493
  %v1196 = vunpack.c.l.b16 %v494
  %v1197 = vunpack.c.h.b16 %v494
  %v1198 = vunpack.c.l.b16 %v495
  %v1199 = vunpack.c.h.b16 %v495
  %v1200 = vunpack.c.l.b16 %v496
  %v1201 = vunpack.c.h.b16 %v496
  %v1202 = vunpack.c.l.b16 %v497
  %v1203 = vunpack.c.h.b16 %v497
  %v1204 = vunpack.c.l.b16 %v498
  %v1205 = vunpack.c.h.b16 %v498
  %v1206 = vunpack.c.l.b16 %v499
  %v1207 = vunpack.c.h.b16 %v499
  %v1208 = vunpack.c.l.b16 %v500
  %v1209 = vunpack.c.h.b16 %v500
  %v1210 = vunpack.c.l.b16 %v501
  %v1211 = vunpack.c.h.b16 %v501
  %v1212 = vunpack.c.l.b16 %v502
  %v1213 = vunpack.c.h.b16 %v502
  %v1214 = vunpack.c.l.b16 %v503
  %v1215 = vunpack.c.h.b16 %v503
  %v1216 = vunpack.c.l.b16 %v504
  %v1217 = vunpack.c.h.b16 %v504
  %v1218 = vunpack.c.l.b16 %v505
  %v1219 = vunpack.c.h.b16 %v505
  %v1220 = vunpack.c.l.b16 %v506
  %v1221 = vunpack.c.h.b16 %v506
  %v1222 = vunpack.c.l.b16 %v507
  %v1223 = vunpack.c.h.b16 %v507
  %v1224 = vunpack.c.l.b16 %v508
  %v1225 = vunpack.c.h.b16 %v508
  %v1226 = vunpack.c.l.b16 %v509
  %v1227 = vunpack.c.h.b16 %v509
  %v1228 = vunpack.c.l.b16 %v510
  %v1229 = vunpack.c.h.b16 %v510
  %v1230 = vunpack.c.l.b16 %v511
  %v1231 = vunpack.c.h.b16 %v511
  %v1232 = vunpack.c.l.b16 %v512
  %v1233 = vunpack.c.h.b16 %v512
  %v1234 = vunpack.c.l.b16 %v513
  %v1235 = vunpack.c.h.b16 %v513
  %v1236 = vunpack.c.l.b16 %v514
  %v1237 = vunpack.c.h.b16 %v514
  %v1238 = vunpack.c.l.b16 %v515
  %v1239 = vunpack.c.h.b16 %v515
  %v1240 = vunpack.c.l.b16 %v516
  %v1241 = vunpack.c.h.b16 %v516
  %v1242 = vunpack.c.l.b16 %v517
  %v1243 = vunpack.c.h.b16 %v517
  %v1244 = vunpack.c.l.b16 %v518
  %v1245 = vunpack.c.h.b16 %v518
  %v1246 = vunpack.c.l.b16 %v519
  %v1247 = vunpack.c.h.b16 %v519
  %v1248 = vunpack.c.l.b16 %v520
  %v1249 = vunpack.c.h.b16 %v520
  %v1250 = vunpack.c.l.b16 %v521
  %v1251 = vunpack.c.h.b16 %v521
  %v1252 = vunpack.c.l.b16 %v522
  %v1253 = vunpack.c.h.b16 %v522
  %v1254 = vunpack.c.l.b16 %v523
  %v1255 = vunpack.c.h.b16 %v523
  %v1256 = vunpack.c.l.b16 %v524
  %v1257 = vunpack.c.h.b16 %v524
  %v1258 = vunpack.c.l.b16 %v525
  %v1259 = vunpack.c.h.b16 %v525
  %v1260 = vunpack.c.l.b16 %v526
  %v1261 = vunpack.c.h.b16 %v526
  %v1262 = vunpack.c.l.b16 %v527
  %v1263 = vunpack.c.h.b16 %v527
  %v1264 = vunpack.c.l.b16 %v528
  %v1265 = vunpack.c.h.b16 %v528
  %v1266 = vunpack.c.l.b16 %v529
  %v1267 = vunpack.c.h.b16 %v529
  %v1268 = vunpack.c.l.b16 %v530
  %v1269 = vunpack.c.h.b16 %v530
  %v1270 = vunpack.c.l.b16 %v531
  %v1271 = vunpack.c.h.b16 %v531
  %v1272 = vunpack.c.l.b16 %v532
  %v1273 = vunpack.c.h.b16 %v532
  %v1274 = vunpack.c.l.b16 %v533
  %v1275 = vunpack.c.h.b16 %v533
  %v1276 = vunpack.c.l.b16 %v534
  %v1277 = vunpack.c.h.b16 %v534
  %v1278 = vunpack.c.l.b16 %v535
  %v1279 = vunpack.c.h.b16 %v535
  %v1280 = vunpack.c.l.b16 %v536
  %v1281 = vunpack.c.h.b16 %v536
  %v1282 = vunpack.c.l.b16 %v537
  %v1283 = vunpack.c.h.b16 %v537
  %v1284 = vunpack.c.l.b16 %v538
  %v1285 = vunpack.c.h.b16 %v538
  %v1286 = vunpack.c.l.b16 %v539
  %v1287 = vunpack.c.h.b16 %v539
  %v1288 = vunpack.c.l.b16 %v540
  %v1289 = vunpack.c.h.b16 %v540
  %v1290 = vunpack.c.l.b16 %v541
  %v1291 = vunpack.c.h.b16 %v541
  %v1292 = vunpack.c.l.b16 %v542
  %v1293 = vunpack.c.h.b16 %v542
  %v1294 = vunpack.c.l.b16 %v543
  %v1295 = vunpack.c.h.b16 %v543
  %v1296 = vunpack.c.l.b16 %v544
  %v1297 = vunpack.c.h.b16 %v544
  %v1298 = vunpack.c.l.b16 %v545
  %v1299 = vunpack.c.h.b16 %v545
  %v1300 = vunpack.c.l.b16 %v546
  %v1301 = vunpack.c.h.b16 %v546
  %v1302 = vunpack.c.l.b16 %v547
  %v1303 = vunpack.c.h.b16 %v547
  %v1304 = vunpack.c.l.b16 %v548
  %v1305 = vunpack.c.h.b16 %v548
  %v1306 = vunpack.c.l.b16 %v549
  %v1307 = vunpack.c.h.b16 %v549
  %v1308 = vunpack.c.l.b16 %v550
  %v1309 = vunpack.c.h.b16 %v550
  %v1310 = vunpack.c.l.b16 %v551
  %v1311 = vunpack.c.h.b16 %v551
  %v1312 = vunpack.c.l.b16 %v552
  %v1313 = vunpack.c.h.b16 %v552
  %v1314 = vunpack.c.l.b16 %v553
  %v1315 = vunpack.c.h.b16 %v553
  %v1316 = vunpack.c.l.b16 %v554
  %v1317 = vunpack.c.h.b16 %v554
  %v1318 = vunpack.c.l.b16 %v555
  %v1319 = vunpack.c.h.b16 %v555
  %v1320 = vunpack.c.l.b16 %v556
  %v1321 = vunpack.c.h.b16 %v556
  %v1322 = vunpack.c.l.b16 %v557
  %v1323 = vunpack.c.h.b16 %v557
  %v1324 = vunpack.c.l.b16 %v558
  %v1325 = vunpack.c.h.b16 %v558
  %v1326 = vunpack.c.l.b16 %v559
  %v1327 = vunpack.c.h.b16 %v559
  %v1328 = vunpack.c.l.b16 %v560
  %v1329 = vunpack.c.h.b16 %v560
  %v1330 = vunpack.c.l.b16 %v561
  %v1331 = vunpack.c.h.b16 %v561
  %v1332 = vunpack.c.l.b16 %v562
  %v1333 = vunpack.c.h.b16 %v562
  %v1334 = vunpack.c.l.b16 %v563
  %v1335 = vunpack.c.h.b16 %v563
  %v1336 = vunpack.c.l.b16 %v564
  %v1337 = vunpack.c.h.b16 %v564
  %v1338 = vunpack.c.l.b16 %v565
  %v1339 = vunpack.c.h.b16 %v565
  %v1340 = vunpack.c.l.b16 %v566
  %v1341 = vunpack.c.h.b16 %v566
  %v1342 = vunpack.c.l.b16 %v567
  %v1343 = vunpack.c.h.b16 %v567
  %v1344 = vunpack.c.l.b16 %v568
  %v1345 = vunpack.c.h.b16 %v568
  %v1346 = vunpack.c.l.b16 %v569
  %v1347 = vunpack.c.h.b16 %v569
  %v1348 = vunpack.c.l.b16 %v570
  %v1349 = vunpack.c.h.b16 %v570
  %v1350 = vunpack.c.l.b16 %v571
  %v1351 = vunpack.c.h.b16 %v571
  %v1352 = vunpack.c.l.b16 %v572
  %v1353 = vunpack.c.h.b16 %v572
  %v1354 = vunpack.c.l.b16 %v573
  %v1355 = vunpack.c.h.b16 %v573
  %v1356 = vunpack.c.l.b16 %v574
  %v1357 = vunpack.c.h.b16 %v574
  %v1358 = vunpack.c.l.b16 %v575
  %v1359 = vunpack.c.h.b16 %v575
  %v1360 = vunpack.c.l.b16 %v576
  %v1361 = vunpack.c.h.b16 %v576
  %v1362 = vunpack.c.l.b16 %v577
  %v1363 = vunpack.c.h.b16 %v577
  %v1364 = vunpack.c.l.b16 %v578
  %v1365 = vunpack.c.h.b16 %v578
  %v1366 = vunpack.c.l.b16 %v579
  %v1367 = vunpack.c.h.b16 %v579
  %v1368 = vunpack.c.l.b16 %v580
  %v1369 = vunpack.c.h.b16 %v580
  %v1370 = vunpack.c.l.b16 %v581
  %v1371 = vunpack.c.h.b16 %v581
  %v1372 = vpack.c.b16 %v864, %v860
  %v1373 = vpack.c.b16 %v865, %v861
  %v1374 = vpack.c.b16 %v866, %v862
  %v1375 = vpack.c.b16 %v867, %v863
  %v1376 = vpack.c.b16 %v872, %v868
  %v1377 = vpack.c.b16 %v873, %v869
  %v1378 = vpack.c.b16 %v874, %v870
  %v1379 = vpack.c.b16 %v875, %v871
  %v1380 = vpack.c.b16 %v880, %v876
  %v1381 = vpack.c.b16 %v881, %v877
  %v1382 = vpack.c.b16 %v882, %v878
  %v1383 = vpack.c.b16 %v883, %v879
  %v1384 = vpack.c.b16 %v888, %v884
  %v1385 = vpack.c.b16 %v889, %v885
  %v1386 = vpack.c.b16 %v890, %v886
  %v1387 = vpack.c.b16 %v891, %v887
  %v1388 = vpack.c.b16 %v896, %v892
  %v1389 = vpack.c.b16 %v897, %v893
  %v1390 = vpack.c.b16 %v898, %v894
  %v1391 = vpack.c.b16 %v899, %v895
  %v1392 = vpack.c.b16 %v904, %v900
  %v1393 = vpack.c.b16 %v905, %v901
  %v1394 = vpack.c.b16 %v906, %v902
  %v1395 = vpack.c.b16 %v907, %v903
  %v1396 = vpack.c.b16 %v912, %v908
  %v1397 = vpack.c.b16 %v913, %v909
  %v1398 = vpack.c.b16 %v914, %v910
  %v1399 = vpack.c.b16 %v915, %v911
  %v1400 = vpack.c.b16 %v920, %v916
  %v1401 = vpack.c.b16 %v921, %v917
  %v1402 = vpack.c.b16 %v922, %v918
  %v1403 = vpack.c.b16 %v923, %v919
  %v1404 = vpack.c.b16 %v928, %v924
  %v1405 = vpack.c.b16 %v929, %v925
  %v1406 = vpack.c.b16 %v930, %v926
  %v1407 = vpack.c.b16 %v931, %v927
  %v1408 = vpack.c.b16 %v936, %v932
  %v1409 = vpack.c.b16 %v937, %v933
  %v1410 = vpack.c.b16 %v938, %v934
  %v1411 = vpack.c.b16 %v939, %v935
  %v1412 = vpack.c.b16 %v944, %v940
  %v1413 = vpack.c.b16 %v945, %v941
  %v1414 = vpack.c.b16 %v946, %v942
  %v1415 = vpack.c.b16 %v947, %v943
  %v1416 = vpack.c.b16 %v952, %v948
  %v1417 = vpack.c.b16 %v953, %v949
  %v1418 = vpack.c.b16 %v954, %v950
  %v1419 = vpack.c.b16 %v955, %v951
  %v1420 = vpack.c.b16 %v960, %v956
  %v1421 = vpack.c.b16 %v961, %v957
  %v1422 = vpack.c.b16 %v962, %v958
  %v1423 = vpack.c.b16 %v963, %v959
  %v1424 = vpack.c.b16 %v968, %v964
  %v1425 = vpack.c.b16 %v969, %v965
  %v1426 = vpack.c.b16 %v970, %v966
  %v1427 = vpack.c.b16 %v971, %v967
  %v1428 = vpack.c.b16 %v976, %v972
  %v1429 = vpack.c.b16 %v977, %v973
  %v1430 = vpack.c.b16 %v978, %v974
  %v1431 = vpack.c.b16 %v979, %v975
  %v1432 = vpack.c.b16 %v984, %v980
  %v1433 = vpack.c.b16 %v985, %v981
  %v1434 = vpack.c.b16 %v986, %v982
  %v1435 = vpack.c.b16 %v987, %v983
  %v1436 = vpack.c.b16 %v992, %v988
  %v1437 = vpack.c.b16 %v993, %v989
  %v1438 = vpack.c.b16 %v994, %v990
  %v1439 = vpack.c.b16 %v995, %v991
  %v1440 = vpack.c.b16 %v1000, %v996
  %v1441 = vpack.c.b16 %v1001, %v997
  %v1442 = vpack.c.b16 %v1002, %v998
  %v1443 = vpack.c.b16 %v1003, %v999
  %v1444 = vpack.c.b16 %v1008, %v1004
  %v1445 = vpack.c.b16 %v1009, %v1005
  %v1446 = vpack.c.b16 %v1010, %v1006
  %v1447 = vpack.c.b16 %v1011, %v1007
  %v1448 = vpack.c.b16 %v1016, %v1012
  %v1449 = vpack.c.b16 %v1017, %v1013
  %v1450 = vpack.c.b16 %v1018, %v1014
  %v1451 = vpack.c.b16 %v1019, %v1015
  %v1452 = vpack.c.b16 %v1024, %v1020
  %v1453 = vpack.c.b16 %v1025, %v1021
  %v1454 = vpack.c.b16 %v1026, %v1022
  %v1455 = vpack.c.b16 %v1027, %v1023
  %v1456 = vpack.c.b16 %v1032, %v1028
  %v1457 = vpack.c.b16 %v1033, %v1029
  %v1458 = vpack.c.b16 %v1034, %v1030
  %v1459 = vpack.c.b16 %v1035, %v1031
  %v1460 = vpack.c.b16 %v1040, %v1036
  %v1461 = vpack.c.b16 %v1041, %v1037
  %v1462 = vpack.c.b16 %v1042, %v1038
  %v1463 = vpack.c.b16 %v1043, %v1039
  %v1464 = vpack.c.b16 %v1048, %v1044
  %v1465 = vpack.c.b16 %v1049, %v1045
  %v1466 = vpack.c.b16 %v1050, %v1046
  %v1467 = vpack.c.b16 %v1051, %v1047
  %v1468 = vpack.c.b16 %v1056, %v1052
  %v1469 = vpack.c.b16 %v1057, %v1053
  %v1470 = vpack.c.b16 %v1058, %v1054
  %v1471 = vpack.c.b16 %v1059, %v1055
  %v1472 = vpack.c.b16 %v1064, %v1060
  %v1473 = vpack.c.b16 %v1065, %v1061
  %v1474 = vpack.c.b16 %v1066, %v1062
  %v1475 = vpack.c.b16 %v1067, %v1063
  %v1476 = vpack.c.b16 %v1072, %v1068
  %v1477 = vpack.c.b16 %v1073, %v1069
  %v1478 = vpack.c.b16 %v1074, %v1070
  %v1479 = vpack.c.b16 %v1075, %v1071
  %v1480 = vpack.c.b16 %v1080, %v1076
  %v1481 = vpack.c.b16 %v1081, %v1077
  %v1482 = vpack.c.b16 %v1082, %v1078
  %v1483 = vpack.c.b16 %v1083, %v1079
  %v1484 = vpack.c.b16 %v1088, %v1084
  %v1485 = vpack.c.b16 %v1089, %v1085
  %v1486 = vpack.c.b16 %v1090, %v1086
  %v1487 = vpack.c.b16 %v1091, %v1087
  %v1488 = vpack.c.b16 %v1096, %v1092
  %v1489 = vpack.c.b16 %v1097, %v1093
  %v1490 = vpack.c.b16 %v1098, %v1094
  %v1491 = vpack.c.b16 %v1099, %v1095
  %v1492 = vpack.c.b16 %v1104, %v1100
  %v1493 = vpack.c.b16 %v1105, %v1101
  %v1494 = vpack.c.b16 %v1106, %v1102
  %v1495 = vpack.c.b16 %v1107, %v1103
  %v1496 = vpack.c.b16 %v1112, %v1108
  %v1497 = vpack.c.b16 %v1113, %v1109
  %v1498 = vpack.c.b16 %v1114, %v1110
  %v1499 = vpack.c.b16 %v1115, %v1111
  %v1500 = vpack.c.b16 %v1120, %v1116
  %v1501 = vpack.c.b16 %v1121, %v1117
  %v1502 = vpack.c.b16 %v1122, %v1118
  %v1503 = vpack.c.b16 %v1123, %v1119
  %v1504 = vpack.c.b16 %v1128, %v1124
  %v1505 = vpack.c.b16 %v1129, %v1125
  %v1506 = vpack.c.b16 %v1130, %v1126
  %v1507 = vpack.c.b16 %v1131, %v1127
  %v1508 = vpack.c.b16 %v1136, %v1132
  %v1509 = vpack.c.b16 %v1137, %v1133
  %v1510 = vpack.c.b16 %v1138, %v1134
  %v1511 = vpack.c.b16 %v1139, %v1135
  %v1512 = vpack.c.b16 %v1144, %v1140
  %v1513 = vpack.c.b16 %v1145, %v1141
  %v1514 = vpack.c.b16 %v1146, %v1142
  %v1515 = vpack.c.b16 %v1147, %v1143
  %v1516 = vpack.c.b16 %v1152, %v1148
  %v1517 = vpack.c.b16 %v1153, %v1149
  %v1518 = vpack.c.b16 %v1154, %v1150
  %v1519 = vpack.c.b16 %v1155, %v1151
  %v1520 = vpack.c.b16 %v1160, %v1156
  %v1521 = vpack.c.b16 %v1161, %v1157
  %v1522 = vpack.c.b16 %v1162, %v1158
  %v1523 = vpack.c.b16 %v1163, %v1159
  %v1524 = vpack.c.b16 %v1168, %v1164
  %v1525 = vpack.c.b16 %v1169, %v1165
  %v1526 = vpack.c.b16 %v1170, %v1166
  %v1527 = vpack.c.b16 %v1171, %v1167
  %v1528 = vpack.c.b16 %v1176, %v1172
  %v1529 = vpack.c.b16 %v1177, %v1173
  %v1530 = vpack.c.b16 %v1178, %v1174
  %v1531 = vpack.c.b16 %v1179, %v1175
  %v1532 = vpack.c.b16 %v1184, %v1180
  %v1533 = vpack.c.b16 %v1185, %v1181
  %v1534 = vpack.c.b16 %v1186, %v1182
  %v1535 = vpack.c.b16 %v1187, %v1183
  %v1536 = vpack.c.b16 %v1192, %v1188
  %v1537 = vpack.c.b16 %v1193, %v1189
  %v1538 = vpack.c.b16 %v1194, %v1190
  %v1539 = vpack.c.b16 %v1195, %v1191
  %v1540 = vpack.c.b16 %v1200, %v1196
  %v1541 = vpack.c.b16 %v1201, %v1197
  %v1542 = vpack.c.b16 %v1202, %v1198
  %v1543 = vpack.c.b16 %v1203, %v1199
  %v1544 = vpack.c.b16 %v1208, %v1204
  %v1545 = vpack.c.b16 %v1209, %v1205
  %v1546 = vpack.c.b16 %v1210, %v1206
  %v1547 = vpack.c.b16 %v1211, %v1207
  %v1548 = vpack.c.b16 %v1216, %v1212
  %v1549 = vpack.c.b16 %v1217, %v1213
  %v1550 = vpack.c.b16 %v1218, %v1214
  %v1551 = vpack.c.b16 %v1219, %v1215
  %v1552 = vpack.c.b16 %v1224, %v1220
  %v1553 = vpack.c.b16 %v1225, %v1221
  %v1554 = vpack.c.b16 %v1226, %v1222
  %v1555 = vpack.c.b16 %v1227, %v1223
  %v1556 = vpack.c.b16 %v1232, %v1228
  %v1557 = vpack.c.b16 %v1233, %v1229
  %v1558 = vpack.c.b16 %v1234, %v1230
  %v1559 = vpack.c.b16 %v1235, %v1231
  %v1560 = vpack.c.b16 %v1240, %v1236
  %v1561 = vpack.c.b16 %v1241, %v1237
  %v1562 = vpack.c.b16 %v1242, %v1238
  %v1563 = vpack.c.b16 %v1243, %v1239
  %v1564 = vpack.c.b16 %v1248, %v1244
  %v1565 = vpack.c.b16 %v1249, %v1245
  %v1566 = vpack.c.b16 %v1250, %v1246
  %v1567 = vpack.c.b16 %v1251, %v1247
  %v1568 = vpack.c.b16 %v1256, %v1252
  %v1569 = vpack.c.b16 %v1257, %v1253
  %v1570 = vpack.c.b16 %v1258, %v1254
  %v1571 = vpack.c.b16 %v1259, %v1255
  %v1572 = vpack.c.b16 %v1264, %v1260
  %v1573 = vpack.c.b16 %v1265, %v1261
  %v1574 = vpack.c.b16 %v1266, %v1262
  %v1575 = vpack.c.b16 %v1267, %v1263
  %v1576 = vpack.c.b16 %v1272, %v1268
  %v1577 = vpack.c.b16 %v1273, %v1269
  %v1578 = vpack.c.b16 %v1274, %v1270
  %v1579 = vpack.c.b16 %v1275, %v1271
  %v1580 = vpack.c.b16 %v1280, %v1276
  %v1581 = vpack.c.b16 %v1281, %v1277
  %v1582 = vpack.c.b16 %v1282, %v1278
  %v1583 = vpack.c.b16 %v1283, %v1279
  %v1584 = vpack.c.b16 %v1288, %v1284
  %v1585 = vpack.c.b16 %v1289, %v1285
  %v1586 = vpack.c.b16 %v1290, %v1286
  %v1587 = vpack.c.b16 %v1291, %v1287
  %v1588 = vpack.c.b16 %v1296, %v1292
  %v1589 = vpack.c.b16 %v1297, %v1293
  %v1590 = vpack.c.b16 %v1298, %v1294
  %v1591 = vpack.c.b16 %v1299, %v1295
  %v1592 = vpack.c.b16 %v1304, %v1300
  %v1593 = vpack.c.b16 %v1305, %v1301
  %v1594 = vpack.c.b16 %v1306, %v1302
  %v1595 = vpack.c.b16 %v1307, %v1303
  %v1596 = vpack.c.b16 %v1312, %v1308
  %v1597 = vpack.c.b16 %v1313, %v1309
  %v1598 = vpack.c.b16 %v1314, %v1310
  %v1599 = vpack.c.b16 %v1315, %v1311
  %v1600 = vpack.c.b16 %v1320, %v1316
  %v1601 = vpack.c.b16 %v1321, %v1317
  %v1602 = vpack.c.b16 %v1322, %v1318
  %v1603 = vpack.c.b16 %v1323, %v1319
  %v1604 = vpack.c.b16 %v1328, %v1324
  %v1605 = vpack.c.b16 %v1329, %v1325
  %v1606 = vpack.c.b16 %v1330, %v1326
  %v1607 = vpack.c.b16 %v1331, %v1327
  %v1608 = vpack.c.b16 %v1336, %v1332
  %v1609 = vpack.c.b16 %v1337, %v1333
  %v1610 = vpack.c.b16 %v1338, %v1334
  %v1611 = vpack.c.b16 %v1339, %v1335
  %v1612 = vpack.c.b16 %v1344, %v1340
  %v1613 = vpack.c.b16 %v1345, %v1341
  %v1614 = vpack.c.b16 %v1346, %v1342
  %v1615 = vpack.c.b16 %v1347, %v1343
  %v1616 = vpack.c.b16 %v1352, %v1348
  %v1617 = vpack.c.b16 %v1353, %v1349
  %v1618 = vpack.c.b16 %v1354, %v1350
  %v1619 = vpack.c.b16 %v1355, %v1351
  %v1620 = vpack.c.b16 %v1360, %v1356
  %v1621 = vpack.c.b16 %v1361, %v1357
  %v1622 = vpack.c.b16 %v1362, %v1358
  %v1623 = vpack.c.b16 %v1363, %v1359
  %v1624 = vpack.c.b16 %v1368, %v1364
  %v1625 = vpack.c.b16 %v1369, %v1365
  %v1626 = vpack.c.b16 %v1370, %v1366
  %v1627 = vpack.c.b16 %v1371, %v1367
  %1884 = vmatprep.subr.bf16.mxu0 %v1373
  %1885 = vmatpush1.bf16.msra.mxu0 %v1372
  %1886 = vmatprep.subr.bf16.mxu0 %v1377
  %1887 = vmatpush1.bf16.msra.mxu0 %v1376
  %1888 = vmatprep.subr.bf16.mxu0 %v1381
  %1889 = vmatpush1.bf16.msra.mxu0 %v1380
  %1890 = vmatprep.subr.bf16.mxu0 %v1385
  %1891 = vmatpush1.bf16.msra.mxu0 %v1384
  %1892 = vmatprep.subr.bf16.mxu0 %v1389
  %1893 = vmatpush1.bf16.msra.mxu0 %v1388
  %1894 = vmatprep.subr.bf16.mxu0 %v1393
  %1895 = vmatpush1.bf16.msra.mxu0 %v1392
  %1896 = vmatprep.subr.bf16.mxu0 %v1397
  %1897 = vmatpush1.bf16.msra.mxu0 %v1396
  %1898 = vmatprep.subr.bf16.mxu0 %v1401
  %1899 = vmatpush1.bf16.msra.mxu0 %v1400
  %1900 = vmatprep.subr.bf16.mxu0 %v1405
  %1901 = vmatpush1.bf16.msra.mxu0 %v1404
  %1902 = vmatprep.subr.bf16.mxu0 %v1409
  %1903 = vmatpush1.bf16.msra.mxu0 %v1408
  %1904 = vmatprep.subr.bf16.mxu0 %v1413
  %1905 = vmatpush1.bf16.msra.mxu0 %v1412
  %1906 = vmatprep.subr.bf16.mxu0 %v1417
  %1907 = vmatpush1.bf16.msra.mxu0 %v1416
  %1908 = vmatprep.subr.bf16.mxu0 %v1421
  %1909 = vmatpush1.bf16.msra.mxu0 %v1420
  %1910 = vmatprep.subr.bf16.mxu0 %v1425
  %1911 = vmatpush1.bf16.msra.mxu0 %v1424
  %1912 = vmatprep.subr.bf16.mxu0 %v1429
  %1913 = vmatpush1.bf16.msra.mxu0 %v1428
  %1914 = vmatprep.subr.bf16.mxu0 %v1433
  %1915 = vmatpush1.bf16.msra.mxu0 %v1432
  %1916 = vmatprep.mubr.bf16.mxu0 %v319
  %1917 = vmatmul.mubr.bf16.gmra.mrb[0].mxu0 %v318
  %v1918 = vpop.f32.mrb[0].mxu0
  %v1919 = vadd.f32 %v587, %v1918
  %v1920 = vpop.f32.mrb[0].mxu0
  %v1921 = vadd.f32 %v591, %v1920
  %v1922 = vpop.f32.mrb[0].mxu0
  %v1923 = vpop.f32.mrb[0].mxu0
  %1924 = vdwg.mxu0
  %1925 = vmatprep.subr.bf16.mxu0 %v1437
  %1926 = vmatpush1.bf16.msra.mxu0 %v1436
  %1927 = vmatprep.subr.bf16.mxu0 %v1441
  %1928 = vmatpush1.bf16.msra.mxu0 %v1440
  %1929 = vmatprep.subr.bf16.mxu0 %v1445
  %1930 = vmatpush1.bf16.msra.mxu0 %v1444
  %1931 = vmatprep.subr.bf16.mxu0 %v1449
  %1932 = vmatpush1.bf16.msra.mxu0 %v1448
  %1933 = vmatprep.subr.bf16.mxu0 %v1453
  %1934 = vmatpush1.bf16.msra.mxu0 %v1452
  %1935 = vmatprep.subr.bf16.mxu0 %v1457
  %1936 = vmatpush1.bf16.msra.mxu0 %v1456
  %1937 = vmatprep.subr.bf16.mxu0 %v1461
  %1938 = vmatpush1.bf16.msra.mxu0 %v1460
  %1939 = vmatprep.subr.bf16.mxu0 %v1465
  %1940 = vmatpush1.bf16.msra.mxu0 %v1464
  %1941 = vmatprep.subr.bf16.mxu0 %v1469
  %1942 = vmatpush1.bf16.msra.mxu0 %v1468
  %1943 = vmatprep.subr.bf16.mxu0 %v1473
  %1944 = vmatpush1.bf16.msra.mxu0 %v1472
  %1945 = vmatprep.subr.bf16.mxu0 %v1477
  %1946 = vmatpush1.bf16.msra.mxu0 %v1476
  %1947 = vmatprep.subr.bf16.mxu0 %v1481
  %1948 = vmatpush1.bf16.msra.mxu0 %v1480
  %1949 = vmatprep.subr.bf16.mxu0 %v1485
  %1950 = vmatpush1.bf16.msra.mxu0 %v1484
  %1951 = vmatprep.subr.bf16.mxu0 %v1489
  %1952 = vmatpush1.bf16.msra.mxu0 %v1488
  %1953 = vmatprep.subr.bf16.mxu0 %v1493
  %1954 = vmatpush1.bf16.msra.mxu0 %v1492
  %1955 = vmatprep.subr.bf16.mxu0 %v1497
  %1956 = vmatpush1.bf16.msra.mxu0 %v1496
  %1957 = vmatprep.mubr.bf16.mxu0 %v321
  %1958 = vmatmul.mubr.bf16.gmra.mrb[0].mxu0 %v320
  %v1959 = vpop.f32.mrb[0].mxu0
  %v1960 = vadd.f32 %v1919, %v1959
  %v1961 = vpop.f32.mrb[0].mxu0
  %v1962 = vadd.f32 %v1921, %v1961
  %v1963 = vpop.f32.mrb[0].mxu0
  %v1964 = vpop.f32.mrb[0].mxu0
  %1965 = vdwg.mxu0
  %1966 = vmatprep.subr.bf16.mxu0 %v1501
  %1967 = vmatpush1.bf16.msra.mxu0 %v1500
  %1968 = vmatprep.subr.bf16.mxu0 %v1505
  %1969 = vmatpush1.bf16.msra.mxu0 %v1504
  %1970 = vmatprep.subr.bf16.mxu0 %v1509
  %1971 = vmatpush1.bf16.msra.mxu0 %v1508
  %1972 = vmatprep.subr.bf16.mxu0 %v1513
  %1973 = vmatpush1.bf16.msra.mxu0 %v1512
  %1974 = vmatprep.subr.bf16.mxu0 %v1517
  %1975 = vmatpush1.bf16.msra.mxu0 %v1516
  %1976 = vmatprep.subr.bf16.mxu0 %v1521
  %1977 = vmatpush1.bf16.msra.mxu0 %v1520
  %1978 = vmatprep.subr.bf16.mxu0 %v1525
  %1979 = vmatpush1.bf16.msra.mxu0 %v1524
  %1980 = vmatprep.subr.bf16.mxu0 %v1529
  %1981 = vmatpush1.bf16.msra.mxu0 %v1528
  %1982 = vmatprep.subr.bf16.mxu0 %v1533
  %1983 = vmatpush1.bf16.msra.mxu0 %v1532
  %1984 = vmatprep.subr.bf16.mxu0 %v1537
  %1985 = vmatpush1.bf16.msra.mxu0 %v1536
  %1986 = vmatprep.subr.bf16.mxu0 %v1541
  %1987 = vmatpush1.bf16.msra.mxu0 %v1540
  %1988 = vmatprep.subr.bf16.mxu0 %v1545
  %1989 = vmatpush1.bf16.msra.mxu0 %v1544
  %1990 = vmatprep.subr.bf16.mxu0 %v1549
  %1991 = vmatpush1.bf16.msra.mxu0 %v1548
  %1992 = vmatprep.subr.bf16.mxu0 %v1553
  %1993 = vmatpush1.bf16.msra.mxu0 %v1552
  %1994 = vmatprep.subr.bf16.mxu0 %v1557
  %1995 = vmatpush1.bf16.msra.mxu0 %v1556
  %1996 = vmatprep.subr.bf16.mxu0 %v1561
  %1997 = vmatpush1.bf16.msra.mxu0 %v1560
  %1998 = vmatprep.mubr.bf16.mxu0 %v323
  %1999 = vmatmul.mubr.bf16.gmra.mrb[0].mxu0 %v322
  %v2000 = vpop.f32.mrb[0].mxu0
  %v2001 = vadd.f32 %v1960, %v2000
  %v2002 = vpop.f32.mrb[0].mxu0
  %v2003 = vadd.f32 %v1962, %v2002
  %v2004 = vpop.f32.mrb[0].mxu0
  %v2005 = vpop.f32.mrb[0].mxu0
  %2006 = vdwg.mxu0
  %2007 = vmatprep.subr.bf16.mxu0 %v1565
  %2008 = vmatpush1.bf16.msra.mxu0 %v1564
  %2009 = vmatprep.subr.bf16.mxu0 %v1569
  %2010 = vmatpush1.bf16.msra.mxu0 %v1568
  %2011 = vmatprep.subr.bf16.mxu0 %v1573
  %2012 = vmatpush1.bf16.msra.mxu0 %v1572
  %2013 = vmatprep.subr.bf16.mxu0 %v1577
  %2014 = vmatpush1.bf16.msra.mxu0 %v1576
  %2015 = vmatprep.subr.bf16.mxu0 %v1581
  %2016 = vmatpush1.bf16.msra.mxu0 %v1580
  %2017 = vmatprep.subr.bf16.mxu0 %v1585
  %2018 = vmatpush1.bf16.msra.mxu0 %v1584
  %2019 = vmatprep.subr.bf16.mxu0 %v1589
  %2020 = vmatpush1.bf16.msra.mxu0 %v1588
  %2021 = vmatprep.subr.bf16.mxu0 %v1593
  %2022 = vmatpush1.bf16.msra.mxu0 %v1592
  %2023 = vmatprep.subr.bf16.mxu0 %v1597
  %2024 = vmatpush1.bf16.msra.mxu0 %v1596
  %2025 = vmatprep.subr.bf16.mxu0 %v1601
  %2026 = vmatpush1.bf16.msra.mxu0 %v1600
  %2027 = vmatprep.subr.bf16.mxu0 %v1605
  %2028 = vmatpush1.bf16.msra.mxu0 %v1604
  %2029 = vmatprep.subr.bf16.mxu0 %v1609
  %2030 = vmatpush1.bf16.msra.mxu0 %v1608
  %2031 = vmatprep.subr.bf16.mxu0 %v1613
  %2032 = vmatpush1.bf16.msra.mxu0 %v1612
  %2033 = vmatprep.subr.bf16.mxu0 %v1617
  %2034 = vmatpush1.bf16.msra.mxu0 %v1616
  %2035 = vmatprep.subr.bf16.mxu0 %v1621
  %2036 = vmatpush1.bf16.msra.mxu0 %v1620
  %2037 = vmatprep.subr.bf16.mxu0 %v1625
  %2038 = vmatpush1.bf16.msra.mxu0 %v1624
  %2039 = vmatprep.mubr.bf16.mxu0 %v325
  %2040 = vmatmul.mubr.bf16.gmra.mrb[0].mxu0 %v324
  %v2041 = vpop.f32.mrb[0].mxu0
  %v2042 = vadd.f32 %v2001, %v2041
  %v2043 = vpop.f32.mrb[0].mxu0
  %v2044 = vadd.f32 %v2003, %v2043
  %v2045 = vpop.f32.mrb[0].mxu0
  %v2046 = vpop.f32.mrb[0].mxu0
  %2047 = vdwg.mxu0
  %2048 = vmatprep.subr.bf16.mxu0 %v1375
  %2049 = vmatpush1.bf16.msra.mxu0 %v1374
  %2050 = vmatprep.subr.bf16.mxu0 %v1379
  %2051 = vmatpush1.bf16.msra.mxu0 %v1378
  %2052 = vmatprep.subr.bf16.mxu0 %v1383
  %2053 = vmatpush1.bf16.msra.mxu0 %v1382
  %2054 = vmatprep.subr.bf16.mxu0 %v1387
  %2055 = vmatpush1.bf16.msra.mxu0 %v1386
  %2056 = vmatprep.subr.bf16.mxu0 %v1391
  %2057 = vmatpush1.bf16.msra.mxu0 %v1390
  %2058 = vmatprep.subr.bf16.mxu0 %v1395
  %2059 = vmatpush1.bf16.msra.mxu0 %v1394
  %2060 = vmatprep.subr.bf16.mxu0 %v1399
  %2061 = vmatpush1.bf16.msra.mxu0 %v1398
  %2062 = vmatprep.subr.bf16.mxu0 %v1403
  %2063 = vmatpush1.bf16.msra.mxu0 %v1402
  %2064 = vmatprep.subr.bf16.mxu0 %v1407
  %2065 = vmatpush1.bf16.msra.mxu0 %v1406
  %2066 = vmatprep.subr.bf16.mxu0 %v1411
  %2067 = vmatpush1.bf16.msra.mxu0 %v1410
  %2068 = vmatprep.subr.bf16.mxu0 %v1415
  %2069 = vmatpush1.bf16.msra.mxu0 %v1414
  %2070 = vmatprep.subr.bf16.mxu0 %v1419
  %2071 = vmatpush1.bf16.msra.mxu0 %v1418
  %2072 = vmatprep.subr.bf16.mxu0 %v1423
  %2073 = vmatpush1.bf16.msra.mxu0 %v1422
  %2074 = vmatprep.subr.bf16.mxu0 %v1427
  %2075 = vmatpush1.bf16.msra.mxu0 %v1426
  %2076 = vmatprep.subr.bf16.mxu0 %v1431
  %2077 = vmatpush1.bf16.msra.mxu0 %v1430
  %2078 = vmatprep.subr.bf16.mxu0 %v1435
  %2079 = vmatpush1.bf16.msra.mxu0 %v1434
  %2080 = vmatprep.mubr.bf16.mxu0 %v319
  %2081 = vmatmul.mubr.bf16.gmra.mrb[0].mxu0 %v318
  %v2082 = vpop.f32.mrb[0].mxu0
  %v2083 = vadd.f32 %v595, %v2082
  %v2084 = vpop.f32.mrb[0].mxu0
  %v2085 = vadd.f32 %v599, %v2084
  %v2086 = vpop.f32.mrb[0].mxu0
  %v2087 = vpop.f32.mrb[0].mxu0
  %2088 = vdwg.mxu0
  %2089 = vmatprep.subr.bf16.mxu0 %v1439
  %2090 = vmatpush1.bf16.msra.mxu0 %v1438
  %2091 = vmatprep.subr.bf16.mxu0 %v1443
  %2092 = vmatpush1.bf16.msra.mxu0 %v1442
  %2093 = vmatprep.subr.bf16.mxu0 %v1447
  %2094 = vmatpush1.bf16.msra.mxu0 %v1446
  %2095 = vmatprep.subr.bf16.mxu0 %v1451
  %2096 = vmatpush1.bf16.msra.mxu0 %v1450
  %2097 = vmatprep.subr.bf16.mxu0 %v1455
  %2098 = vmatpush1.bf16.msra.mxu0 %v1454
  %2099 = vmatprep.subr.bf16.mxu0 %v1459
  %2100 = vmatpush1.bf16.msra.mxu0 %v1458
  %2101 = vmatprep.subr.bf16.mxu0 %v1463
  %2102 = vmatpush1.bf16.msra.mxu0 %v1462
  %2103 = vmatprep.subr.bf16.mxu0 %v1467
  %2104 = vmatpush1.bf16.msra.mxu0 %v1466
  %2105 = vmatprep.subr.bf16.mxu0 %v1471
  %2106 = vmatpush1.bf16.msra.mxu0 %v1470
  %2107 = vmatprep.subr.bf16.mxu0 %v1475
  %2108 = vmatpush1.bf16.msra.mxu0 %v1474
  %2109 = vmatprep.subr.bf16.mxu0 %v1479
  %2110 = vmatpush1.bf16.msra.mxu0 %v1478
  %2111 = vmatprep.subr.bf16.mxu0 %v1483
  %2112 = vmatpush1.bf16.msra.mxu0 %v1482
  %2113 = vmatprep.subr.bf16.mxu0 %v1487
  %2114 = vmatpush1.bf16.msra.mxu0 %v1486
  %2115 = vmatprep.subr.bf16.mxu0 %v1491
  %2116 = vmatpush1.bf16.msra.mxu0 %v1490
  %2117 = vmatprep.subr.bf16.mxu0 %v1495
  %2118 = vmatpush1.bf16.msra.mxu0 %v1494
  %2119 = vmatprep.subr.bf16.mxu0 %v1499
  %2120 = vmatpush1.bf16.msra.mxu0 %v1498
  %2121 = vmatprep.mubr.bf16.mxu0 %v321
  %2122 = vmatmul.mubr.bf16.gmra.mrb[0].mxu0 %v320
  %v2123 = vpop.f32.mrb[0].mxu0
  %v2124 = vadd.f32 %v2083, %v2123
  %v2125 = vpop.f32.mrb[0].mxu0
  %v2126 = vadd.f32 %v2085, %v2125
  %v2127 = vpop.f32.mrb[0].mxu0
  %v2128 = vpop.f32.mrb[0].mxu0
  %2129 = vdwg.mxu0
  %2130 = vmatprep.subr.bf16.mxu0 %v1503
  %2131 = vmatpush1.bf16.msra.mxu0 %v1502
  %2132 = vmatprep.subr.bf16.mxu0 %v1507
  %2133 = vmatpush1.bf16.msra.mxu0 %v1506
  %2134 = vmatprep.subr.bf16.mxu0 %v1511
  %2135 = vmatpush1.bf16.msra.mxu0 %v1510
  %2136 = vmatprep.subr.bf16.mxu0 %v1515
  %2137 = vmatpush1.bf16.msra.mxu0 %v1514
  %2138 = vmatprep.subr.bf16.mxu0 %v1519
  %2139 = vmatpush1.bf16.msra.mxu0 %v1518
  %2140 = vmatprep.subr.bf16.mxu0 %v1523
  %2141 = vmatpush1.bf16.msra.mxu0 %v1522
  %2142 = vmatprep.subr.bf16.mxu0 %v1527
  %2143 = vmatpush1.bf16.msra.mxu0 %v1526
  %2144 = vmatprep.subr.bf16.mxu0 %v1531
  %2145 = vmatpush1.bf16.msra.mxu0 %v1530
  %2146 = vmatprep.subr.bf16.mxu0 %v1535
  %2147 = vmatpush1.bf16.msra.mxu0 %v1534
  %2148 = vmatprep.subr.bf16.mxu0 %v1539
  %2149 = vmatpush1.bf16.msra.mxu0 %v1538
  %2150 = vmatprep.subr.bf16.mxu0 %v1543
  %2151 = vmatpush1.bf16.msra.mxu0 %v1542
  %2152 = vmatprep.subr.bf16.mxu0 %v1547
  %2153 = vmatpush1.bf16.msra.mxu0 %v1546
  %2154 = vmatprep.subr.bf16.mxu0 %v1551
  %2155 = vmatpush1.bf16.msra.mxu0 %v1550
  %2156 = vmatprep.subr.bf16.mxu0 %v1555
  %2157 = vmatpush1.bf16.msra.mxu0 %v1554
  %2158 = vmatprep.subr.bf16.mxu0 %v1559
  %2159 = vmatpush1.bf16.msra.mxu0 %v1558
  %2160 = vmatprep.subr.bf16.mxu0 %v1563
  %2161 = vmatpush1.bf16.msra.mxu0 %v1562
  %2162 = vmatprep.mubr.bf16.mxu0 %v323
  %2163 = vmatmul.mubr.bf16.gmra.mrb[0].mxu0 %v322
  %v2164 = vpop.f32.mrb[0].mxu0
  %v2165 = vadd.f32 %v2124, %v2164
  %v2166 = vpop.f32.mrb[0].mxu0
  %v2167 = vadd.f32 %v2126, %v2166
  %v2168 = vpop.f32.mrb[0].mxu0
  %v2169 = vpop.f32.mrb[0].mxu0
  %2170 = vdwg.mxu0
  %2171 = vmatprep.subr.bf16.mxu0 %v1567
  %2172 = vmatpush1.bf16.msra.mxu0 %v1566
  %2173 = vmatprep.subr.bf16.mxu0 %v1571
  %2174 = vmatpush1.bf16.msra.mxu0 %v1570
  %2175 = vmatprep.subr.bf16.mxu0 %v1575
  %2176 = vmatpush1.bf16.msra.mxu0 %v1574
  %2177 = vmatprep.subr.bf16.mxu0 %v1579
  %2178 = vmatpush1.bf16.msra.mxu0 %v1578
  %2179 = vmatprep.subr.bf16.mxu0 %v1583
  %2180 = vmatpush1.bf16.msra.mxu0 %v1582
  %2181 = vmatprep.subr.bf16.mxu0 %v1587
  %2182 = vmatpush1.bf16.msra.mxu0 %v1586
  %2183 = vmatprep.subr.bf16.mxu0 %v1591
  %2184 = vmatpush1.bf16.msra.mxu0 %v1590
  %2185 = vmatprep.subr.bf16.mxu0 %v1595
  %2186 = vmatpush1.bf16.msra.mxu0 %v1594
  %2187 = vmatprep.subr.bf16.mxu0 %v1599
  %2188 = vmatpush1.bf16.msra.mxu0 %v1598
  %2189 = vmatprep.subr.bf16.mxu0 %v1603
  %2190 = vmatpush1.bf16.msra.mxu0 %v1602
  %2191 = vmatprep.subr.bf16.mxu0 %v1607
  %2192 = vmatpush1.bf16.msra.mxu0 %v1606
  %2193 = vmatprep.subr.bf16.mxu0 %v1611
  %2194 = vmatpush1.bf16.msra.mxu0 %v1610
  %2195 = vmatprep.subr.bf16.mxu0 %v1615
  %2196 = vmatpush1.bf16.msra.mxu0 %v1614
  %2197 = vmatprep.subr.bf16.mxu0 %v1619
  %2198 = vmatpush1.bf16.msra.mxu0 %v1618
  %2199 = vmatprep.subr.bf16.mxu0 %v1623
  %2200 = vmatpush1.bf16.msra.mxu0 %v1622
  %2201 = vmatprep.subr.bf16.mxu0 %v1627
  %2202 = vmatpush1.bf16.msra.mxu0 %v1626
  %2203 = vmatprep.mubr.bf16.mxu0 %v325
  %2204 = vmatmul.mubr.bf16.gmra.mrb[0].mxu0 %v324
  %v2205 = vpop.f32.mrb[0].mxu0
  %v2206 = vadd.f32 %v2165, %v2205
  %v2207 = vpop.f32.mrb[0].mxu0
  %v2208 = vadd.f32 %v2167, %v2207
  %v2209 = vpop.f32.mrb[0].mxu0
  %v2210 = vpop.f32.mrb[0].mxu0
  %2211 = vdwg.mxu0
  %v2212 = vmax.f32 %v2042, 0.0
  %v2213 = vmax.f32 %v2044, 0.0
  %v2214 = vmax.f32 %v2206, 0.0
  %v2215 = vmax.f32 %v2208, 0.0
  %v2216 = vpack.c.bf16 %v2212, %v2212
  %v2217 = vpack.c.bf16 %v2213, %v2213
  %v2218 = vpack.c.bf16 %v2214, %v2214
  %v2219 = vpack.c.bf16 %v2215, %v2215
  %v2220 = vld [vmem:[%s5] sm:$0xf]
  %v2221 = vld [vmem:[%s5 + $0x4] sm:$0xf]
  %v2222 = vld [vmem:[%s5 + $0x8] sm:$0xf]
  %v2223 = vld [vmem:[%s5 + $0xc] sm:$0xf]
  %v2224 = vld [vmem:[%s5 + $0x10] sm:$0xf]
  %v2225 = vld [vmem:[%s5 + $0x14] sm:$0xf]
  %v2226 = vld [vmem:[%s5 + $0x18] sm:$0xf]
  %v2227 = vld [vmem:[%s5 + $0x1c] sm:$0xf]
  %v2228 = vld [vmem:[%s5 + $0x20] sm:$0xf]
  %v2229 = vld [vmem:[%s5 + $0x24] sm:$0xf]
  %v2230 = vld [vmem:[%s5 + $0x28] sm:$0xf]
  %v2231 = vld [vmem:[%s5 + $0x2c] sm:$0xf]
  %v2232 = vld [vmem:[%s5 + $0x30] sm:$0xf]
  %v2233 = vld [vmem:[%s5 + $0x34] sm:$0xf]
  %v2234 = vld [vmem:[%s5 + $0x38] sm:$0xf]
  %v2235 = vld [vmem:[%s5 + $0x3c] sm:$0xf]
  %v2236 = vld [vmem:[%s5 + $0x40] sm:$0xf]
  %v2237 = vld [vmem:[%s5 + $0x44] sm:$0xf]
  %v2238 = vld [vmem:[%s5 + $0x48] sm:$0xf]
  %v2239 = vld [vmem:[%s5 + $0x4c] sm:$0xf]
  %v2240 = vld [vmem:[%s5 + $0x50] sm:$0xf]
  %v2241 = vld [vmem:[%s5 + $0x54] sm:$0xf]
  %v2242 = vld [vmem:[%s5 + $0x58] sm:$0xf]
  %v2243 = vld [vmem:[%s5 + $0x5c] sm:$0xf]
  %v2244 = vld [vmem:[%s5 + $0x60] sm:$0xf]
  %v2245 = vld [vmem:[%s5 + $0x64] sm:$0xf]
  %v2246 = vld [vmem:[%s5 + $0x68] sm:$0xf]
  %v2247 = vld [vmem:[%s5 + $0x6c] sm:$0xf]
  %v2248 = vld [vmem:[%s5 + $0x70] sm:$0xf]
  %v2249 = vld [vmem:[%s5 + $0x74] sm:$0xf]
  %v2250 = vld [vmem:[%s5 + $0x78] sm:$0xf]
  %v2251 = vld [vmem:[%s5 + $0x7c] sm:$0xf]
  %v2252 = vld [vmem:[%s5 + $0x80] sm:$0xf]
  %v2253 = vld [vmem:[%s5 + $0x84] sm:$0xf]
  %v2254 = vld [vmem:[%s5 + $0x88] sm:$0xf]
  %v2255 = vld [vmem:[%s5 + $0x8c] sm:$0xf]
  %v2256 = vld [vmem:[%s5 + $0x90] sm:$0xf]
  %v2257 = vld [vmem:[%s5 + $0x94] sm:$0xf]
  %v2258 = vld [vmem:[%s5 + $0x98] sm:$0xf]
  %v2259 = vld [vmem:[%s5 + $0x9c] sm:$0xf]
  %v2260 = vld [vmem:[%s5 + $0xa0] sm:$0xf]
  %v2261 = vld [vmem:[%s5 + $0xa4] sm:$0xf]
  %v2262 = vld [vmem:[%s5 + $0xa8] sm:$0xf]
  %v2263 = vld [vmem:[%s5 + $0xac] sm:$0xf]
  %v2264 = vld [vmem:[%s5 + $0xb0] sm:$0xf]
  %v2265 = vld [vmem:[%s5 + $0xb4] sm:$0xf]
  %v2266 = vld [vmem:[%s5 + $0xb8] sm:$0xf]
  %v2267 = vld [vmem:[%s5 + $0xbc] sm:$0xf]
  %v2268 = vld [vmem:[%s5 + $0xc0] sm:$0xf]
  %v2269 = vld [vmem:[%s5 + $0xc4] sm:$0xf]
  %v2270 = vld [vmem:[%s5 + $0xc8] sm:$0xf]
  %v2271 = vld [vmem:[%s5 + $0xcc] sm:$0xf]
  %v2272 = vld [vmem:[%s5 + $0xd0] sm:$0xf]
  %v2273 = vld [vmem:[%s5 + $0xd4] sm:$0xf]
  %v2274 = vld [vmem:[%s5 + $0xd8] sm:$0xf]
  %v2275 = vld [vmem:[%s5 + $0xdc] sm:$0xf]
  %v2276 = vld [vmem:[%s5 + $0xe0] sm:$0xf]
  %v2277 = vld [vmem:[%s5 + $0xe4] sm:$0xf]
  %v2278 = vld [vmem:[%s5 + $0xe8] sm:$0xf]
  %v2279 = vld [vmem:[%s5 + $0xec] sm:$0xf]
  %v2280 = vld [vmem:[%s5 + $0xf0] sm:$0xf]
  %v2281 = vld [vmem:[%s5 + $0xf4] sm:$0xf]
  %v2282 = vld [vmem:[%s5 + $0xf8] sm:$0xf]
  %v2283 = vld [vmem:[%s5 + $0xfc] sm:$0xf]
  %v2284 = vld [vmem:[%s6] sm:$0x1]
  %v2286 = vlaneseq
  %v2287 = vshrl.u32 %v2286, 7
  %v2288 = vsub.s32 0, %v2287
  %v2289 = vrot.slane %v2284, %v2288
  %v2355 = vunpack.c.l.b16 %v2220
  %v2356 = vunpack.c.l.b16 %v2221
  %v2357 = vunpack.c.l.b16 %v2222
  %v2358 = vunpack.c.l.b16 %v2223
  %v2359 = vunpack.c.l.b16 %v2224
  %v2360 = vunpack.c.l.b16 %v2225
  %v2361 = vunpack.c.l.b16 %v2226
  %v2362 = vunpack.c.l.b16 %v2227
  %v2363 = vunpack.c.l.b16 %v2228
  %v2364 = vunpack.c.l.b16 %v2229
  %v2365 = vunpack.c.l.b16 %v2230
  %v2366 = vunpack.c.l.b16 %v2231
  %v2367 = vunpack.c.l.b16 %v2232
  %v2368 = vunpack.c.l.b16 %v2233
  %v2369 = vunpack.c.l.b16 %v2234
  %v2370 = vunpack.c.l.b16 %v2235
  %v2371 = vunpack.c.l.b16 %v2236
  %v2372 = vunpack.c.l.b16 %v2237
  %v2373 = vunpack.c.l.b16 %v2238
  %v2374 = vunpack.c.l.b16 %v2239
  %v2375 = vunpack.c.l.b16 %v2240
  %v2376 = vunpack.c.l.b16 %v2241
  %v2377 = vunpack.c.l.b16 %v2242
  %v2378 = vunpack.c.l.b16 %v2243
  %v2379 = vunpack.c.l.b16 %v2244
  %v2380 = vunpack.c.l.b16 %v2245
  %v2381 = vunpack.c.l.b16 %v2246
  %v2382 = vunpack.c.l.b16 %v2247
  %v2383 = vunpack.c.l.b16 %v2248
  %v2384 = vunpack.c.l.b16 %v2249
  %v2385 = vunpack.c.l.b16 %v2250
  %v2386 = vunpack.c.l.b16 %v2251
  %v2387 = vunpack.c.l.b16 %v2252
  %v2388 = vunpack.c.l.b16 %v2253
  %v2389 = vunpack.c.l.b16 %v2254
  %v2390 = vunpack.c.l.b16 %v2255
  %v2391 = vunpack.c.l.b16 %v2256
  %v2392 = vunpack.c.l.b16 %v2257
  %v2393 = vunpack.c.l.b16 %v2258
  %v2394 = vunpack.c.l.b16 %v2259
  %v2395 = vunpack.c.l.b16 %v2260
  %v2396 = vunpack.c.l.b16 %v2261
  %v2397 = vunpack.c.l.b16 %v2262
  %v2398 = vunpack.c.l.b16 %v2263
  %v2399 = vunpack.c.l.b16 %v2264
  %v2400 = vunpack.c.l.b16 %v2265
  %v2401 = vunpack.c.l.b16 %v2266
  %v2402 = vunpack.c.l.b16 %v2267
  %v2403 = vunpack.c.l.b16 %v2268
  %v2404 = vunpack.c.l.b16 %v2269
  %v2405 = vunpack.c.l.b16 %v2270
  %v2406 = vunpack.c.l.b16 %v2271
  %v2407 = vunpack.c.l.b16 %v2272
  %v2408 = vunpack.c.l.b16 %v2273
  %v2409 = vunpack.c.l.b16 %v2274
  %v2410 = vunpack.c.l.b16 %v2275
  %v2411 = vunpack.c.l.b16 %v2276
  %v2412 = vunpack.c.l.b16 %v2277
  %v2413 = vunpack.c.l.b16 %v2278
  %v2414 = vunpack.c.l.b16 %v2279
  %v2415 = vunpack.c.l.b16 %v2280
  %v2416 = vunpack.c.l.b16 %v2281
  %v2417 = vunpack.c.l.b16 %v2282
  %v2418 = vunpack.c.l.b16 %v2283
  %v2419 = vpack.c.b16 %v2356, %v2355
  %v2420 = vpack.c.b16 %v2358, %v2357
  %v2421 = vpack.c.b16 %v2360, %v2359
  %v2422 = vpack.c.b16 %v2362, %v2361
  %v2423 = vpack.c.b16 %v2364, %v2363
  %v2424 = vpack.c.b16 %v2366, %v2365
  %v2425 = vpack.c.b16 %v2368, %v2367
  %v2426 = vpack.c.b16 %v2370, %v2369
  %v2427 = vpack.c.b16 %v2372, %v2371
  %v2428 = vpack.c.b16 %v2374, %v2373
  %v2429 = vpack.c.b16 %v2376, %v2375
  %v2430 = vpack.c.b16 %v2378, %v2377
  %v2431 = vpack.c.b16 %v2380, %v2379
  %v2432 = vpack.c.b16 %v2382, %v2381
  %v2433 = vpack.c.b16 %v2384, %v2383
  %v2434 = vpack.c.b16 %v2386, %v2385
  %v2435 = vpack.c.b16 %v2388, %v2387
  %v2436 = vpack.c.b16 %v2390, %v2389
  %v2437 = vpack.c.b16 %v2392, %v2391
  %v2438 = vpack.c.b16 %v2394, %v2393
  %v2439 = vpack.c.b16 %v2396, %v2395
  %v2440 = vpack.c.b16 %v2398, %v2397
  %v2441 = vpack.c.b16 %v2400, %v2399
  %v2442 = vpack.c.b16 %v2402, %v2401
  %v2443 = vpack.c.b16 %v2404, %v2403
  %v2444 = vpack.c.b16 %v2406, %v2405
  %v2445 = vpack.c.b16 %v2408, %v2407
  %v2446 = vpack.c.b16 %v2410, %v2409
  %v2447 = vpack.c.b16 %v2412, %v2411
  %v2448 = vpack.c.b16 %v2414, %v2413
  %v2449 = vpack.c.b16 %v2416, %v2415
  %v2450 = vpack.c.b16 %v2418, %v2417
  %2483 = vmatprep.subr.bf16.mxu0 0
  %2484 = vmatpush1.bf16.msra.mxu0 %v2419
  %2485 = vmatprep.subr.bf16.mxu0 0
  %2486 = vmatpush1.bf16.msra.mxu0 %v2420
  %2487 = vmatprep.subr.bf16.mxu0 0
  %2488 = vmatpush1.bf16.msra.mxu0 %v2421
  %2489 = vmatprep.subr.bf16.mxu0 0
  %2490 = vmatpush1.bf16.msra.mxu0 %v2422
  %2491 = vmatprep.subr.bf16.mxu0 0
  %2492 = vmatpush1.bf16.msra.mxu0 %v2423
  %2493 = vmatprep.subr.bf16.mxu0 0
  %2494 = vmatpush1.bf16.msra.mxu0 %v2424
  %2495 = vmatprep.subr.bf16.mxu0 0
  %2496 = vmatpush1.bf16.msra.mxu0 %v2425
  %2497 = vmatprep.subr.bf16.mxu0 0
  %2498 = vmatpush1.bf16.msra.mxu0 %v2426
  %2499 = vmatprep.subr.bf16.mxu0 0
  %2500 = vmatpush1.bf16.msra.mxu0 %v2427
  %2501 = vmatprep.subr.bf16.mxu0 0
  %2502 = vmatpush1.bf16.msra.mxu0 %v2428
  %2503 = vmatprep.subr.bf16.mxu0 0
  %2504 = vmatpush1.bf16.msra.mxu0 %v2429
  %2505 = vmatprep.subr.bf16.mxu0 0
  %2506 = vmatpush1.bf16.msra.mxu0 %v2430
  %2507 = vmatprep.subr.bf16.mxu0 0
  %2508 = vmatpush1.bf16.msra.mxu0 %v2431
  %2509 = vmatprep.subr.bf16.mxu0 0
  %2510 = vmatpush1.bf16.msra.mxu0 %v2432
  %2511 = vmatprep.subr.bf16.mxu0 0
  %2512 = vmatpush1.bf16.msra.mxu0 %v2433
  %2513 = vmatprep.subr.bf16.mxu0 0
  %2514 = vmatpush1.bf16.msra.mxu0 %v2434
  %2515 = vmatprep.mubr.bf16.mxu0 %v2217
  %2516 = vmatmul.mubr.bf16.gmra.mrb[0].mxu0 %v2216
  %v2517 = vpop.f32.mrb[0].mxu0
  %v2518 = vadd.f32 %v2289, %v2517
  %v2519 = vpop.f32.mrb[0].mxu0
  %v2520 = vpop.f32.mrb[0].mxu0
  %v2521 = vpop.f32.mrb[0].mxu0
  %2522 = vdwg.mxu0
  %2523 = vmatprep.subr.bf16.mxu0 0
  %2524 = vmatpush1.bf16.msra.mxu0 %v2435
  %2525 = vmatprep.subr.bf16.mxu0 0
  %2526 = vmatpush1.bf16.msra.mxu0 %v2436
  %2527 = vmatprep.subr.bf16.mxu0 0
  %2528 = vmatpush1.bf16.msra.mxu0 %v2437
  %2529 = vmatprep.subr.bf16.mxu0 0
  %2530 = vmatpush1.bf16.msra.mxu0 %v2438
  %2531 = vmatprep.subr.bf16.mxu0 0
  %2532 = vmatpush1.bf16.msra.mxu0 %v2439
  %2533 = vmatprep.subr.bf16.mxu0 0
  %2534 = vmatpush1.bf16.msra.mxu0 %v2440
  %2535 = vmatprep.subr.bf16.mxu0 0
  %2536 = vmatpush1.bf16.msra.mxu0 %v2441
  %2537 = vmatprep.subr.bf16.mxu0 0
  %2538 = vmatpush1.bf16.msra.mxu0 %v2442
  %2539 = vmatprep.subr.bf16.mxu0 0
  %2540 = vmatpush1.bf16.msra.mxu0 %v2443
  %2541 = vmatprep.subr.bf16.mxu0 0
  %2542 = vmatpush1.bf16.msra.mxu0 %v2444
  %2543 = vmatprep.subr.bf16.mxu0 0
  %2544 = vmatpush1.bf16.msra.mxu0 %v2445
  %2545 = vmatprep.subr.bf16.mxu0 0
  %2546 = vmatpush1.bf16.msra.mxu0 %v2446
  %2547 = vmatprep.subr.bf16.mxu0 0
  %2548 = vmatpush1.bf16.msra.mxu0 %v2447
  %2549 = vmatprep.subr.bf16.mxu0 0
  %2550 = vmatpush1.bf16.msra.mxu0 %v2448
  %2551 = vmatprep.subr.bf16.mxu0 0
  %2552 = vmatpush1.bf16.msra.mxu0 %v2449
  %2553 = vmatprep.subr.bf16.mxu0 0
  %2554 = vmatpush1.bf16.msra.mxu0 %v2450
  %2555 = vmatprep.mubr.bf16.mxu0 %v2219
  %2556 = vmatmul.mubr.bf16.gmra.mrb[0].mxu0 %v2218
  %v2557 = vpop.f32.mrb[0].mxu0
  %v2558 = vadd.f32 %v2518, %v2557
  %v2559 = vpop.f32.mrb[0].mxu0
  %v2560 = vpop.f32.mrb[0].mxu0
  %v2561 = vpop.f32.mrb[0].mxu0
  %2562 = vdwg.mxu0
  %v2563 = vmax.f32 %v2558, 0.0
  %v2564 = vpack.c.bf16 %v2563, %v2563
  %v2565 = vld [vmem:[%s7] sm:$0xf]
  %v2566 = vld [vmem:[%s7 + $0x4] sm:$0xf]
  %v2567 = vld [vmem:[%s7 + $0x8] sm:$0xf]
  %v2568 = vld [vmem:[%s7 + $0xc] sm:$0xf]
  %v2569 = vld [vmem:[%s7 + $0x10] sm:$0xf]
  %v2570 = vld [vmem:[%s7 + $0x14] sm:$0xf]
  %v2571 = vld [vmem:[%s7 + $0x18] sm:$0xf]
  %v2572 = vld [vmem:[%s7 + $0x1c] sm:$0xf]
  %v2573 = vld [vmem:[%s7 + $0x20] sm:$0xf]
  %v2574 = vld [vmem:[%s7 + $0x24] sm:$0xf]
  %v2575 = vld [vmem:[%s7 + $0x28] sm:$0xf]
  %v2576 = vld [vmem:[%s7 + $0x2c] sm:$0xf]
  %v2577 = vld [vmem:[%s7 + $0x30] sm:$0xf]
  %v2578 = vld [vmem:[%s7 + $0x34] sm:$0xf]
  %v2579 = vld [vmem:[%s7 + $0x38] sm:$0xf]
  %v2580 = vld [vmem:[%s7 + $0x3c] sm:$0xf]
  %v2581 = vld [vmem:[%s8] sm:$0x1]
  %v2583 = vlaneseq
  %v2584 = vshrl.u32 %v2583, 7
  %v2585 = vsub.s32 0, %v2584
  %v2586 = vrot.slane %v2581, %v2585
  %v2604 = vunpack.c.l.b16 %v2565
  %v2605 = vunpack.c.l.b16 %v2566
  %v2606 = vunpack.c.l.b16 %v2567
  %v2607 = vunpack.c.l.b16 %v2568
  %v2608 = vunpack.c.l.b16 %v2569
  %v2609 = vunpack.c.l.b16 %v2570
  %v2610 = vunpack.c.l.b16 %v2571
  %v2611 = vunpack.c.l.b16 %v2572
  %v2612 = vunpack.c.l.b16 %v2573
  %v2613 = vunpack.c.l.b16 %v2574
  %v2614 = vunpack.c.l.b16 %v2575
  %v2615 = vunpack.c.l.b16 %v2576
  %v2616 = vunpack.c.l.b16 %v2577
  %v2617 = vunpack.c.l.b16 %v2578
  %v2618 = vunpack.c.l.b16 %v2579
  %v2619 = vunpack.c.l.b16 %v2580
  %v2620 = vpack.c.b16 %v2605, %v2604
  %v2621 = vpack.c.b16 %v2607, %v2606
  %v2622 = vpack.c.b16 %v2609, %v2608
  %v2623 = vpack.c.b16 %v2611, %v2610
  %v2624 = vpack.c.b16 %v2613, %v2612
  %v2625 = vpack.c.b16 %v2615, %v2614
  %v2626 = vpack.c.b16 %v2617, %v2616
  %v2627 = vpack.c.b16 %v2619, %v2618
  %2636 = vmatprep.subr.bf16.mxu0 0
  %2637 = vmatpush1.bf16.msra.mxu0 %v2620
  %2638 = vmatprep.subr.bf16.mxu0 0
  %2639 = vmatpush1.bf16.msra.mxu0 %v2621
  %2640 = vmatprep.subr.bf16.mxu0 0
  %2641 = vmatpush1.bf16.msra.mxu0 %v2622
  %2642 = vmatprep.subr.bf16.mxu0 0
  %2643 = vmatpush1.bf16.msra.mxu0 %v2623
  %2644 = vmatprep.subr.bf16.mxu0 0
  %2645 = vmatpush1.bf16.msra.mxu0 %v2624
  %2646 = vmatprep.subr.bf16.mxu0 0
  %2647 = vmatpush1.bf16.msra.mxu0 %v2625
  %2648 = vmatprep.subr.bf16.mxu0 0
  %2649 = vmatpush1.bf16.msra.mxu0 %v2626
  %2650 = vmatprep.subr.bf16.mxu0 0
  %2651 = vmatpush1.bf16.msra.mxu0 %v2627
  %2652 = vmatprep.subr.bf16.mxu0 0
  %2653 = vmatpush1.bf16.msra.mxu0 0
  %2654 = vmatprep.subr.bf16.mxu0 0
  %2655 = vmatpush1.bf16.msra.mxu0 0
  %2656 = vmatprep.subr.bf16.mxu0 0
  %2657 = vmatpush1.bf16.msra.mxu0 0
  %2658 = vmatprep.subr.bf16.mxu0 0
  %2659 = vmatpush1.bf16.msra.mxu0 0
  %2660 = vmatprep.subr.bf16.mxu0 0
  %2661 = vmatpush1.bf16.msra.mxu0 0
  %2662 = vmatprep.subr.bf16.mxu0 0
  %2663 = vmatpush1.bf16.msra.mxu0 0
  %2664 = vmatprep.subr.bf16.mxu0 0
  %2665 = vmatpush1.bf16.msra.mxu0 0
  %2666 = vmatprep.subr.bf16.mxu0 0
  %2667 = vmatpush1.bf16.msra.mxu0 0
  %2668 = vmatprep.mubr.bf16.mxu0 0
  %2669 = vmatmul.mubr.bf16.gmra.mrb[0].mxu0 %v2564
  %v2670 = vpop.f32.mrb[0].mxu0
  %v2671 = vadd.f32 %v2586, %v2670
  %v2672 = vpop.f32.mrb[0].mxu0
  %v2673 = vpop.f32.mrb[0].mxu0
  %v2674 = vpop.f32.mrb[0].mxu0
  %2675 = vdwg.mxu0
  %2676 = vst [vmem:[%s9] sm:$0xff] %v2671
  // Predicated region
  $region38: #{linearnet_forward.1} parent=0 // pred_check
    _
  $region39: #{linearnet_forward.1} parent=0 // pred_check_branch
    %2678 = sbr.rel (0) target = $region41
  $region40: #{linearnet_forward.1} parent=0 // pred_region
    _
  $region41: #{linearnet_forward.1} parent=0 // pred_fallthru
    _
  // Predicated region
  $region42: #{linearnet_forward.1} parent=0 // pred_check
    _
  $region43: #{linearnet_forward.1} parent=0 // pred_check_branch
    %2680 = sbr.rel (0) target = $region45
  $region44: #{linearnet_forward.1} parent=0 // pred_region
    _
  $region45: #{linearnet_forward.1} parent=0 // pred_fallthru
    _

</llo_original>
